<compile_context>
chip_gen: v7x
topology: tpu7x:2x2x1
jax: 0.10.0
libtpu: 0.0.40
codegen_flags: <defaults>
</compile_context>

<pallas_src>
import functools

import numpy as np
import jax
import jax.numpy as jnp
from jax.experimental import pallas as pl
from jax.experimental.pallas import tpu as pltpu


# ---------------------------------------------------------------------------
# Fused Pallas kernel: q_sample -> linear model -> scaled MSE, both modalities
# ---------------------------------------------------------------------------

def _fused_trainer_kernel(coef_ref, x0_ref, xn_ref, y0_ref, yn_ref, wy_ref,
                          wx_hbm, xpart_ref, ypart_ref, wx_vmem, dma_sem,
                          *, x_inv_count, y_inv_count, shard_n):
    i = pl.program_id(0)

    # ---- 1. kick off this shard's Wx column block (contiguous) HBM -> VMEM --
    wx_copy = pltpu.make_async_copy(wx_hbm.at[i], wx_vmem, dma_sem)
    wx_copy.start()

    # ---- 2. work that does NOT need Wx, hidden under the DMA -----------------
    sa = coef_ref[:, 0:1]                               # [B, 1] sqrt(alpha_bar)
    sb = coef_ref[:, 1:2]                               # [B, 1] sqrt(1-alpha_bar)
    scale = sa / sb                                     # exact divide (parity)

    x0 = x0_ref[...]                                    # [B, Nx] f32
    x_t = sa * x0 + sb * xn_ref[...]                    # q_sample (full K needed)
    x_t_bf16 = x_t.astype(jnp.bfloat16)                 # bf16 only at MXU boundary

    # y path is tiny (32 lanes); computing it on every shard is ~free and gives
    # every grid step compute to hide its Wx DMA behind.
    y0 = y0_ref[...]                                    # [B, Ny] f32
    y_t = sa * y0 + sb * yn_ref[...]
    y_pred = jnp.dot(y_t, wy_ref[...], preferred_element_type=jnp.float32)
    dy = (y_pred - y0) * scale
    y_loss = jnp.sum(dy * dy) * y_inv_count

    # ---- 3. wait for the weight shard, then the x matmul + partial MSE ------
    wx_copy.wait()
    x_pred = jnp.dot(x_t_bf16, wx_vmem[...],
                     preferred_element_type=jnp.float32)      # [B, shard_n] f32
    col0 = pl.multiple_of(i * shard_n, 128)
    x0_shard = x0_ref[:, pl.ds(col0, shard_n)]                # matching columns
    dx = (x_pred - x0_shard) * scale
    x_part = jnp.sum(dx * dx) * x_inv_count                   # partial global mean

    # Lane-dense (1,128) stores; wrapper reads lane 0.
    xpart_ref[...] = jnp.full((1, 128), x_part, jnp.float32)
    ypart_ref[...] = jnp.full((1, 128), y_loss, jnp.float32)


def fused_trainer_step(coef, x0, xn, y0, yn, wx_split, wy):
    """One pallas_call computing (x_loss, y_loss) for the whole batch."""
    B, Nx = x0.shape
    Ny = y0.shape[1]
    S, Kx, Nshard = wx_split.shape
    assert Kx == Nx and S * Nshard == Nx

    kernel = functools.partial(
        _fused_trainer_kernel,
        x_inv_count=1.0 / float(B * Nx),   # true global-mean divisors
        y_inv_count=1.0 / float(B * Ny),
        shard_n=Nshard,
    )

    def full_spec(shape):
        return pl.BlockSpec(shape, lambda i, _s=shape: (0,) * len(_s))

    x_part, y_part = pl.pallas_call(
        kernel,
        grid=(S,),
        out_shape=(jax.ShapeDtypeStruct((S, 128), jnp.float32),
                   jax.ShapeDtypeStruct((S, 128), jnp.float32)),
        in_specs=[
            full_spec((B, 2)),                    # [sa, sb] coefficients
            full_spec((B, Nx)),                   # x_0
            full_spec((B, Nx)),                   # x_noise
            full_spec((B, Ny)),                   # y_0
            full_spec((B, Ny)),                   # y_noise
            full_spec((Ny, Ny)),                  # Wy (4 KiB, f32)
            pl.BlockSpec(memory_space=pl.ANY),    # Wx shards (HBM; manual DMA)
        ],
        out_specs=(pl.BlockSpec((1, 128), lambda i: (i, 0)),
                   pl.BlockSpec((1, 128), lambda i: (i, 0))),
        scratch_shapes=[pltpu.VMEM((Kx, Nshard), wx_split.dtype),
                        pltpu.SemaphoreType.DMA(())],
        compiler_params=pltpu.CompilerParams(
            dimension_semantics=("parallel",),
            vmem_limit_bytes=8 * 1024 * 1024),
    )(coef, x0, xn, y0, yn, wy, wx_split)

    x_loss = jnp.sum(x_part[:, 0])     # sum column-shard partials -> global mean
    y_loss = y_part[0, 0]              # identical on every shard; take shard 0
    return x_loss, y_loss


# ---------------------------------------------------------------------------
# TensorCore-count detection (perf-only; any outcome is correct)
# ---------------------------------------------------------------------------

def _num_column_shards():
    """2 column shards when the chip has 2 TensorCores (e.g. v7x), else 1."""
    try:
        dev = jax.devices()[0]
        n_cores = getattr(dev, "num_cores", None)
        if n_cores is None:
            kind = str(getattr(dev, "device_kind", "")).lower()
            n_cores = 2 if ("v7" in kind or "7x" in kind) else 1
        return 2 if int(n_cores) >= 2 else 1
    except Exception:
        return 1


# ---------------------------------------------------------------------------
# Synthetic denoising model (the PyTorch module takes `model` as an argument).
# ---------------------------------------------------------------------------

class SyntheticModel:
    """Deterministic linear stand-in for the external denoising model.

    TODO(synk): the real conditional UNet passed to GaussianDiffusionTrainer is
    external and cannot be fused generically; with a real model the fused
    kernel splits into qsample kernel -> model -> loss kernel, and the weight
    tiling must be re-derived per generation (v7x has 64 MiB VMEM).  The
    timestep embedding and input_dropout_opt are ignored by this stand-in.
    """

    def __init__(self, x_feat, y_feat, num_shards=1):
        assert x_feat % (128 * num_shards) == 0
        wx = (0.9 * jnp.eye(x_feat, dtype=jnp.float32)
              + 0.01 * jnp.ones((x_feat, x_feat), jnp.float32) / x_feat)
        wy = (0.9 * jnp.eye(y_feat, dtype=jnp.float32)
              + 0.01 * jnp.ones((y_feat, y_feat), jnp.float32) / y_feat)
        shard = x_feat // num_shards
        # Pre-split Wx by output columns -> (S, K, N/S): each shard is a
        # contiguous 1-2 MiB block for a single cheap DMA.  bf16 halves the
        # dominant HBM fetch; the matmul accumulates in f32.
        self.Wx_split = jnp.transpose(
            wx.reshape(x_feat, num_shards, shard), (1, 0, 2)).astype(jnp.bfloat16)
        self.Wy = wy                                   # 32x32, keep f32
        self.num_shards = num_shards


# ---------------------------------------------------------------------------
# GaussianDiffusionTrainer
# ---------------------------------------------------------------------------

class GaussianDiffusionTrainer:
    def __init__(self, model, beta_1, beta_T, T, logsnr):
        self.model = model
        self.T = T
        self.logsnr = logsnr
        # buffers computed in float64 (matching torch .double()), used as f32
        betas = np.linspace(beta_1, beta_T, T, dtype=np.float64)
        alphas = 1.0 - betas
        alphas_bar = np.cumprod(alphas)
        self.sqrt_alphas_bar = jnp.asarray(np.sqrt(alphas_bar), jnp.float32)
        self.sqrt_one_minus_alphas_bar = jnp.asarray(
            np.sqrt(1.0 - alphas_bar), jnp.float32)
        self.difflogsnr = jnp.asarray(betas / (1.0 - alphas_bar), jnp.float32)

    def __call__(self, key, x_0, y_0, input_dropout_opt):
        B = x_0.shape[0]
        k_t, k_xn, k_yn = jax.random.split(key, 3)

        # timestep sampling (glue / RNG, plain JAX)
        if self.logsnr:
            # multinomial(difflogsnr, replacement=True) == categorical over the
            # log of the (unnormalized) weights
            t = jax.random.categorical(k_t, jnp.log(self.difflogsnr), shape=(B,))
        else:
            t = jax.random.randint(k_t, (B,), 0, self.T)

        # Gaussian noise kept in jax.random (matches torch.randn_like exactly).
        x_noise = jax.random.normal(k_xn, x_0.shape, x_0.dtype)
        y_noise = jax.random.normal(k_yn, y_0.shape, y_0.dtype)

        # extract(...) -> per-sample coefficients, packed into one (B, 2) array.
        sa = self.sqrt_alphas_bar[t].reshape(B, 1)
        sb = self.sqrt_one_minus_alphas_bar[t].reshape(B, 1)
        coef = jnp.concatenate([sa, sb], axis=1)

        x0_flat = x_0.reshape(B, -1)
        xn_flat = x_noise.reshape(B, -1)
        y0_flat = y_0.reshape(B, -1)
        yn_flat = y_noise.reshape(B, -1)

        # Single fused Pallas kernel: q_sample -> model -> scaled MSE.
        # (t is unused by the synthetic linear model.)
        x_loss, y_loss = fused_trainer_step(
            coef, x0_flat, xn_flat, y0_flat, yn_flat,
            self.model.Wx_split, self.model.Wy)
        return x_loss, y_loss


# ---------------------------------------------------------------------------
# main
# ---------------------------------------------------------------------------

if __name__ == "__main__":
    B, C, H, W = 2, 4, 16, 16
    Dy = 32
    T = 1000

    key = jax.random.PRNGKey(0)
    k_x, k_y, k_fwd = jax.random.split(key, 3)
    x_0 = jax.random.normal(k_x, (B, C, H, W), jnp.float32)  # NCHW, like PyTorch
    y_0 = jax.random.normal(k_y, (B, Dy), jnp.float32)

    num_shards = _num_column_shards()   # 2 on 2-TC chips (v7x), else 1
    model = SyntheticModel(x_feat=C * H * W, y_feat=Dy, num_shards=num_shards)
    trainer = GaussianDiffusionTrainer(model, beta_1=1e-4, beta_T=0.02,
                                       T=T, logsnr=True)

    x_loss, y_loss = trainer(k_fwd, x_0, y_0, input_dropout_opt=None)
    jax.block_until_ready((x_loss, y_loss))
    assert x_loss.shape == () and y_loss.shape == ()
    assert jnp.isfinite(x_loss) and jnp.isfinite(y_loss)
    print("KERNEL_OK")
</pallas_src>

<mosaic_0001>
module attributes {stable_mosaic.version = 11 : i64} {
  func.func @_fused_trainer_kernel(%arg0: i32, %arg1: memref<2x2xf32, #tpu.memory_space<vmem>>, %arg2: memref<2x1024xf32, #tpu.memory_space<vmem>>, %arg3: memref<2x1024xf32, #tpu.memory_space<vmem>>, %arg4: memref<2x32xf32, #tpu.memory_space<vmem>>, %arg5: memref<2x32xf32, #tpu.memory_space<vmem>>, %arg6: memref<32x32xf32, #tpu.memory_space<vmem>>, %arg7: memref<1x1024x1024xbf16, #tpu.memory_space<any>>, %arg8: memref<1x128xf32, #tpu.memory_space<vmem>>, %arg9: memref<1x128xf32, #tpu.memory_space<vmem>>, %arg10: memref<1024x1024xbf16, #tpu.memory_space<vmem>>, %arg11: memref<!tpu.dma_semaphore, #tpu.memory_space<semaphore_mem>>) attributes {dimension_semantics = [#tpu.dimension_semantics<parallel>], iteration_bounds = array<i64: 1>, scalar_prefetch = 0 : i64, scratch_operands = 2 : i64, tpu.core_type = #tpu.core_type<tc>, window_params = [{pipeline_mode = #tpu.pipeline_mode<synchronous>, transform_indices = @transform_0, window_bounds = array<i64: 2, 2>}, {pipeline_mode = #tpu.pipeline_mode<synchronous>, transform_indices = @transform_1, window_bounds = array<i64: 2, 1024>}, {pipeline_mode = #tpu.pipeline_mode<synchronous>, transform_indices = @transform_2, window_bounds = array<i64: 2, 1024>}, {pipeline_mode = #tpu.pipeline_mode<synchronous>, transform_indices = @transform_3, window_bounds = array<i64: 2, 32>}, {pipeline_mode = #tpu.pipeline_mode<synchronous>, transform_indices = @transform_4, window_bounds = array<i64: 2, 32>}, {pipeline_mode = #tpu.pipeline_mode<synchronous>, transform_indices = @transform_5, window_bounds = array<i64: 32, 32>}, {}, {transform_indices = @transform_7, window_bounds = array<i64: 1, 128>}, {transform_indices = @transform_8, window_bounds = array<i64: 1, 128>}]} {
    %c0_i32 = arith.constant 0 : i32
    %c0_i32_0 = arith.constant 0 : i32
    %0 = tpu.memref_slice %arg7[%arg0, %c0_i32, %c0_i32_0] : memref<1x1024x1024xbf16, #tpu.memory_space<any>> -> memref<1x1024x1024xbf16, #tpu.memory_space<any>>
    %1 = tpu.memref_squeeze %0 : memref<1x1024x1024xbf16, #tpu.memory_space<any>> -> memref<1024x1024xbf16, #tpu.memory_space<any>>
    tpu.enqueue_dma source(%1 : memref<1024x1024xbf16, #tpu.memory_space<any>>) target(%arg10 : memref<1024x1024xbf16, #tpu.memory_space<vmem>>) target_semaphore(%arg11 : memref<!tpu.dma_semaphore, #tpu.memory_space<semaphore_mem>>)
    %c0 = arith.constant 0 : index
    %c0_1 = arith.constant 0 : index
    %2 = vector.load %arg1[%c0, %c0_1] : memref<2x2xf32, #tpu.memory_space<vmem>>, vector<2x1xf32>
    %c0_2 = arith.constant 0 : index
    %c1 = arith.constant 1 : index
    %3 = vector.load %arg1[%c0_2, %c1] : memref<2x2xf32, #tpu.memory_space<vmem>>, vector<2x1xf32>
    %4 = arith.divf %2, %3 : vector<2x1xf32>
    %c0_3 = arith.constant 0 : index
    %c0_4 = arith.constant 0 : index
    %5 = vector.load %arg2[%c0_3, %c0_4] : memref<2x1024xf32, #tpu.memory_space<vmem>>, vector<2x1024xf32>
    %6 = vector.broadcast %2 : vector<2x1xf32> to vector<2x1024xf32>
    %7 = arith.mulf %6, %5 : vector<2x1024xf32>
    %c0_5 = arith.constant 0 : index
    %c0_6 = arith.constant 0 : index
    %8 = vector.load %arg3[%c0_5, %c0_6] : memref<2x1024xf32, #tpu.memory_space<vmem>>, vector<2x1024xf32>
    %9 = vector.broadcast %3 : vector<2x1xf32> to vector<2x1024xf32>
    %10 = arith.mulf %9, %8 : vector<2x1024xf32>
    %11 = arith.addf %7, %10 : vector<2x1024xf32>
    %12 = arith.truncf %11 : vector<2x1024xf32> to vector<2x1024xbf16>
    %c0_7 = arith.constant 0 : index
    %c0_8 = arith.constant 0 : index
    %13 = vector.load %arg4[%c0_7, %c0_8] : memref<2x32xf32, #tpu.memory_space<vmem>>, vector<2x32xf32>
    %14 = vector.broadcast %2 : vector<2x1xf32> to vector<2x32xf32>
    %15 = arith.mulf %14, %13 : vector<2x32xf32>
    %c0_9 = arith.constant 0 : index
    %c0_10 = arith.constant 0 : index
    %16 = vector.load %arg5[%c0_9, %c0_10] : memref<2x32xf32, #tpu.memory_space<vmem>>, vector<2x32xf32>
    %17 = vector.broadcast %3 : vector<2x1xf32> to vector<2x32xf32>
    %18 = arith.mulf %17, %16 : vector<2x32xf32>
    %19 = arith.addf %15, %18 : vector<2x32xf32>
    %c0_11 = arith.constant 0 : index
    %c0_12 = arith.constant 0 : index
    %20 = vector.load %arg6[%c0_11, %c0_12] : memref<32x32xf32, #tpu.memory_space<vmem>>, vector<32x32xf32>
    %cst = arith.constant dense<0.000000e+00> : vector<2x32xf32>
    %21 = tpu.matmul %19, %20, %cst {dimension_numbers = #tpu.dot_dimension_numbers<[1], [0], [0], [1], [0, 0, 1, 1], [], []>} : vector<2x32xf32>, vector<32x32xf32>, vector<2x32xf32> -> vector<2x32xf32>
    %22 = arith.subf %21, %13 : vector<2x32xf32>
    %23 = vector.broadcast %4 : vector<2x1xf32> to vector<2x32xf32>
    %24 = arith.mulf %22, %23 : vector<2x32xf32>
    %25 = arith.mulf %24, %24 : vector<2x32xf32>
    %26 = vector.shape_cast %25 : vector<2x32xf32> to vector<1x2x32xf32>
    %cst_13 = arith.constant dense<0.000000e+00> : vector<1xf32>
    %27 = vector.multi_reduction <add>, %26, %cst_13 [1, 2] : vector<1x2x32xf32> to vector<1xf32>
    %28 = vector.shape_cast %27 : vector<1xf32> to vector<1x1x1xf32>
    %29 = vector.extract %28[0, 0, 0] : f32 from vector<1x1x1xf32>
    %cst_14 = arith.constant 1.562500e-02 : f32
    %30 = arith.mulf %29, %cst_14 : f32
    %c0_i32_15 = arith.constant 0 : i32
    %c0_i32_16 = arith.constant 0 : i32
    %31 = tpu.memref_slice %arg7[%arg0, %c0_i32_15, %c0_i32_16] : memref<1x1024x1024xbf16, #tpu.memory_space<any>> -> memref<1x1024x1024xbf16, #tpu.memory_space<any>>
    %32 = tpu.memref_squeeze %31 : memref<1x1024x1024xbf16, #tpu.memory_space<any>> -> memref<1024x1024xbf16, #tpu.memory_space<any>>
    tpu.wait_dma2 semaphore(%arg11 : memref<!tpu.dma_semaphore, #tpu.memory_space<semaphore_mem>>) src(%32 : memref<1024x1024xbf16, #tpu.memory_space<any>>) dst(%arg10 : memref<1024x1024xbf16, #tpu.memory_space<vmem>>)
    %c0_17 = arith.constant 0 : index
    %c0_18 = arith.constant 0 : index
    %33 = vector.load %arg10[%c0_17, %c0_18] : memref<1024x1024xbf16, #tpu.memory_space<vmem>>, vector<1024x1024xbf16>
    %cst_19 = arith.constant dense<0.000000e+00> : vector<2x1024xf32>
    %34 = tpu.matmul %12, %33, %cst_19 {dimension_numbers = #tpu.dot_dimension_numbers<[1], [0], [0], [1], [0, 0, 1, 1], [], []>} : vector<2x1024xbf16>, vector<1024x1024xbf16>, vector<2x1024xf32> -> vector<2x1024xf32>
    %c1024_i32 = arith.constant 1024 : i32
    %35 = arith.muli %arg0, %c1024_i32 : i32
    %36 = tpu.assume_multiple %35, 128 : i32
    %c0_20 = arith.constant 0 : index
    %37 = arith.index_cast %36 : i32 to index
    %38 = vector.load %arg2[%c0_20, %37] : memref<2x1024xf32, #tpu.memory_space<vmem>>, vector<2x1024xf32>
    %39 = arith.subf %34, %38 : vector<2x1024xf32>
    %40 = vector.broadcast %4 : vector<2x1xf32> to vector<2x1024xf32>
    %41 = arith.mulf %39, %40 : vector<2x1024xf32>
    %42 = arith.mulf %41, %41 : vector<2x1024xf32>
    %43 = vector.shape_cast %42 : vector<2x1024xf32> to vector<1x2x1024xf32>
    %cst_21 = arith.constant dense<0.000000e+00> : vector<1xf32>
    %44 = vector.multi_reduction <add>, %43, %cst_21 [1, 2] : vector<1x2x1024xf32> to vector<1xf32>
    %45 = vector.shape_cast %44 : vector<1xf32> to vector<1x1x1xf32>
    %46 = vector.extract %45[0, 0, 0] : f32 from vector<1x1x1xf32>
    %cst_22 = arith.constant 4.8828125E-4 : f32
    %47 = arith.mulf %46, %cst_22 : f32
    %48 = vector.broadcast %47 : f32 to vector<1x128xf32>
    %c0_23 = arith.constant 0 : index
    %c0_24 = arith.constant 0 : index
    %49 = vector.load %arg8[%c0_23, %c0_24] : memref<1x128xf32, #tpu.memory_space<vmem>>, vector<1x128xf32>
    tpu.vector_store %arg8[%c0_23, %c0_24], %48 {strides = array<i32>} : memref<1x128xf32, #tpu.memory_space<vmem>>, vector<1x128xf32>,
    %50 = vector.broadcast %30 : f32 to vector<1x128xf32>
    %c0_25 = arith.constant 0 : index
    %c0_26 = arith.constant 0 : index
    %51 = vector.load %arg9[%c0_25, %c0_26] : memref<1x128xf32, #tpu.memory_space<vmem>>, vector<1x128xf32>
    tpu.vector_store %arg9[%c0_25, %c0_26], %50 {strides = array<i32>} : memref<1x128xf32, #tpu.memory_space<vmem>>, vector<1x128xf32>,
    return
  }
  func.func @transform_0(%arg0: i32) -> (i32, i32) {
    %c0_i32 = arith.constant 0 : i32
    %c0_i32_0 = arith.constant 0 : i32
    %c0_i32_1 = arith.constant 0 : i32
    return %c0_i32, %c0_i32_0 : i32, i32
  }
  func.func @transform_1(%arg0: i32) -> (i32, i32) {
    %c0_i32 = arith.constant 0 : i32
    %c0_i32_0 = arith.constant 0 : i32
    %c0_i32_1 = arith.constant 0 : i32
    return %c0_i32, %c0_i32_0 : i32, i32
  }
  func.func @transform_2(%arg0: i32) -> (i32, i32) {
    %c0_i32 = arith.constant 0 : i32
    %c0_i32_0 = arith.constant 0 : i32
    %c0_i32_1 = arith.constant 0 : i32
    return %c0_i32, %c0_i32_0 : i32, i32
  }
  func.func @transform_3(%arg0: i32) -> (i32, i32) {
    %c0_i32 = arith.constant 0 : i32
    %c0_i32_0 = arith.constant 0 : i32
    %c0_i32_1 = arith.constant 0 : i32
    return %c0_i32, %c0_i32_0 : i32, i32
  }
  func.func @transform_4(%arg0: i32) -> (i32, i32) {
    %c0_i32 = arith.constant 0 : i32
    %c0_i32_0 = arith.constant 0 : i32
    %c0_i32_1 = arith.constant 0 : i32
    return %c0_i32, %c0_i32_0 : i32, i32
  }
  func.func @transform_5(%arg0: i32) -> (i32, i32) {
    %c0_i32 = arith.constant 0 : i32
    %c0_i32_0 = arith.constant 0 : i32
    %c0_i32_1 = arith.constant 0 : i32
    return %c0_i32, %c0_i32_0 : i32, i32
  }
  func.func @transform_7(%arg0: i32) -> (i32, i32) {
    %c0_i32 = arith.constant 0 : i32
    %c0_i32_0 = arith.constant 0 : i32
    return %arg0, %c0_i32 : i32, i32
  }
  func.func @transform_8(%arg0: i32) -> (i32, i32) {
    %c0_i32 = arith.constant 0 : i32
    %c0_i32_0 = arith.constant 0 : i32
    return %arg0, %c0_i32 : i32, i32
  }
}

</mosaic_0001>

<llo_original>
// kernel: tpu_custom_call.1
$region0: #{tpu_custom_call.1}
  #allocation0 [shape = 'u32[]', space=smem, size = 0x4, offset = 0x4, fixed_abs, tag = 'smem constant byte address 0x4 - core index']
  #allocation1 [shape = 'u32[144,128]{1,0:T(1,128)}', space=vmem, size = 0x12000, scoped, tag = 'internal scratch']
  #allocation2 [shape = 'bf16[1024,1024]{1,0:T(16,128)(2,1)}', space=vmem, size = 0x200000, scoped, tag = 'scratch operand']
  #allocation3 [shape = 's32[1]{0}', space=sflag, size = 0x4, scoped, tag = 'scratch operand']
  #allocation18 [shape = 's32[]', space=sflag, size = 0x4, offset = 0, fixed_abs, tag = 'sflag constant byte address 0x0 - dummy sync flag']
  %s0 = inlined_call_operand.hbm [shape: f32[2,2], index: 0, kind: input, shape index: {}]
  %s1 = inlined_call_operand.hbm [shape: f32[2,1024], index: 1, kind: input, shape index: {}]
  %s2 = inlined_call_operand.hbm [shape: f32[2,1024], index: 2, kind: input, shape index: {}]
  %s3 = inlined_call_operand.hbm [shape: f32[2,32], index: 3, kind: input, shape index: {}]
  %s4 = inlined_call_operand.hbm [shape: f32[2,32], index: 4, kind: input, shape index: {}]
  %s5 = inlined_call_operand.hbm [shape: f32[32,32], index: 5, kind: input, shape index: {}]
  %s6 = inlined_call_operand.hbm [shape: bf16[1,1024,1024], index: 6, kind: input, shape index: {}]
  %s7 = inlined_call_operand.hbm [shape: f32[1,128], index: 7, kind: output, shape index: {0}]
  %s8 = inlined_call_operand.hbm [shape: f32[1,128], index: 8, kind: output, shape index: {1}]
  %9 = xla_tuple %s7, %s8
  %s10 = sld [smem:[#allocation0]]
  $region66: #{tpu_custom_call.1} parent=0
    _
  %s12 = ssub.s32 1, %s10
  %s13 = scalar_select 0, %s12, %s10
  $region1: #{tpu_custom_call.1} parent=0
    #allocation4 [shape = 'u8[1024]{0}', space=vmem, size = 0x400, scoped, tag = 'input window, operand 0, single buffered']
    #allocation5 [shape = 's32[1]{0}', space=sflag, size = 0x4, scoped, tag = 'scoped memory for tpu_custom_call.1']
    #allocation6 [shape = 's32[1]{0}', space=sflag, size = 0x4, scoped, tag = 'scoped memory for tpu_custom_call.1']
    #allocation7 [shape = 'u8[8192]{0}', space=vmem, size = 0x2000, scoped, tag = 'input window, operand 1, single buffered']
    #allocation8 [shape = 's32[1]{0}', space=sflag, size = 0x4, scoped, tag = 'scoped memory for tpu_custom_call.1']
    #allocation9 [shape = 'u8[8192]{0}', space=vmem, size = 0x2000, scoped, tag = 'input window, operand 2, single buffered']
    #allocation10 [shape = 'u8[1024]{0}', space=vmem, size = 0x400, scoped, tag = 'input window, operand 3, single buffered']
    #allocation11 [shape = 's32[1]{0}', space=sflag, size = 0x4, scoped, tag = 'scoped memory for tpu_custom_call.1']
    #allocation12 [shape = 'u8[1024]{0}', space=vmem, size = 0x400, scoped, tag = 'input window, operand 4, single buffered']
    #allocation13 [shape = 'u8[16384]{0}', space=vmem, size = 0x4000, scoped, tag = 'input window, operand 5, single buffered']
    #allocation14 [shape = 's32[1]{0}', space=sflag, size = 0x4, scoped, tag = 'scoped memory for tpu_custom_call.1']
    #allocation15 [shape = 'u8[512]{0}', space=vmem, size = 0x400, scoped, tag = 'output window, operand 0, single buffered']
    #allocation16 [shape = 'u8[512]{0}', space=vmem, size = 0x400, scoped, tag = 'output window, operand 1, single buffered']
    #allocation17 [shape = 's32[1]{0}', space=sflag, size = 0x4, scoped, tag = 'scoped memory for tpu_custom_call.1']
    #allocation19 [shape = 'u32[9]{0}', space=smem, size = 0x24, scoped, tag = 'DMA stride descriptor']
    %14 = vsyncpa [#allocation5], 0
    %15 = vsyncpa [#allocation8], 0
    %16 = vsyncpa [#allocation11], 0
    %17 = vsyncpa [#allocation14], 0
    %18 = vsyncpa [#allocation6], 0
    %19 = vsyncpa [#allocation17], 0
    // Predicated region
    $region2: #{tpu_custom_call.1} parent=1 // pred_check
      _
    $region3: #{tpu_custom_call.1} parent=1 // pred_check_branch
      %21 = sbr.rel (0) target = $region5
    $region4: #{tpu_custom_call.1} parent=1 // pred_region
      %s23 = ssub.s32 32, 32
      %24 = vsyncadd [#allocation5], %s23
      %s26 = sshll.u32 [#allocation4], 4
      %s27 = int_to_ptr.vmem [resolvable:$true] %s26
      %29 = dma.hbm_to_vmem [thread:$0]  %s0, 32, %s27, [#allocation5]
    $region5: #{tpu_custom_call.1} parent=1 // pred_fallthru
      _
    // Predicated region
    $region6: #{tpu_custom_call.1} parent=1 // pred_check
      _
    $region7: #{tpu_custom_call.1} parent=1 // pred_check_branch
      %31 = sbr.rel (0) target = $region9
    $region8: #{tpu_custom_call.1} parent=1 // pred_region
      %s33 = ssub.s32 256, 256
      %34 = vsyncadd [#allocation8], %s33
      %s36 = sshll.u32 [#allocation7], 4
      %s37 = int_to_ptr.vmem [resolvable:$true] %s36
      %39 = dma.hbm_to_vmem [thread:$0]  %s1, 256, %s37, [#allocation8]
    $region9: #{tpu_custom_call.1} parent=1 // pred_fallthru
      _
    // Predicated region
    $region10: #{tpu_custom_call.1} parent=1 // pred_check
      _
    $region11: #{tpu_custom_call.1} parent=1 // pred_check_branch
      %41 = sbr.rel (0) target = $region13
    $region12: #{tpu_custom_call.1} parent=1 // pred_region
      %s43 = ssub.s32 256, 256
      %44 = vsyncadd [#allocation8], %s43
      %s46 = sshll.u32 [#allocation9], 4
      %s47 = int_to_ptr.vmem [resolvable:$true] %s46
      %49 = dma.hbm_to_vmem [thread:$0]  %s2, 256, %s47, [#allocation8]
    $region13: #{tpu_custom_call.1} parent=1 // pred_fallthru
      _
    // Predicated region
    $region14: #{tpu_custom_call.1} parent=1 // pred_check
      _
    $region15: #{tpu_custom_call.1} parent=1 // pred_check_branch
      %51 = sbr.rel (0) target = $region17
    $region16: #{tpu_custom_call.1} parent=1 // pred_region
      %s53 = ssub.s32 32, 32
      %54 = vsyncadd [#allocation11], %s53
      %s56 = sshll.u32 [#allocation10], 4
      %s57 = int_to_ptr.vmem [resolvable:$true] %s56
      %59 = dma.hbm_to_vmem [thread:$0]  %s3, 32, %s57, [#allocation11]
    $region17: #{tpu_custom_call.1} parent=1 // pred_fallthru
      _
    // Predicated region
    $region18: #{tpu_custom_call.1} parent=1 // pred_check
      _
    $region19: #{tpu_custom_call.1} parent=1 // pred_check_branch
      %61 = sbr.rel (0) target = $region21
    $region20: #{tpu_custom_call.1} parent=1 // pred_region
      %s63 = ssub.s32 32, 32
      %64 = vsyncadd [#allocation11], %s63
      %s66 = sshll.u32 [#allocation12], 4
      %s67 = int_to_ptr.vmem [resolvable:$true] %s66
      %69 = dma.hbm_to_vmem [thread:$0]  %s4, 32, %s67, [#allocation11]
    $region21: #{tpu_custom_call.1} parent=1 // pred_fallthru
      _
    // Predicated region
    $region22: #{tpu_custom_call.1} parent=1 // pred_check
      _
    $region23: #{tpu_custom_call.1} parent=1 // pred_check_branch
      %71 = sbr.rel (0) target = $region25
    $region24: #{tpu_custom_call.1} parent=1 // pred_region
      %s73 = ssub.s32 512, 512
      %74 = vsyncadd [#allocation14], %s73
      %s75 = sshll.u32 [#allocation13], 4
      %s76 = int_to_ptr.vmem [resolvable:$true] %s75
      %81 = dma.hbm_to_vmem [thread:$0]  %s5, 512, %s76, [#allocation14], 128, 128, 8
    $region25: #{tpu_custom_call.1} parent=1 // pred_fallthru
      _
    // Predicated region
    $region26: #{tpu_custom_call.1} parent=1 // pred_check
      _
    $region27: #{tpu_custom_call.1} parent=1 // pred_check_branch
      %83 = sbr.rel (0) target = $region29
    $region28: #{tpu_custom_call.1} parent=1 // pred_region
      %84 = dma.done [#allocation5], 32
    $region29: #{tpu_custom_call.1} parent=1 // pred_fallthru
      _
    // Predicated region
    $region30: #{tpu_custom_call.1} parent=1 // pred_check
      _
    $region31: #{tpu_custom_call.1} parent=1 // pred_check_branch
      %86 = sbr.rel (0) target = $region33
    $region32: #{tpu_custom_call.1} parent=1 // pred_region
      %87 = dma.done [#allocation8], 256
    $region33: #{tpu_custom_call.1} parent=1 // pred_fallthru
      _
    // Predicated region
    $region34: #{tpu_custom_call.1} parent=1 // pred_check
      _
    $region35: #{tpu_custom_call.1} parent=1 // pred_check_branch
      %89 = sbr.rel (0) target = $region37
    $region36: #{tpu_custom_call.1} parent=1 // pred_region
      %90 = dma.done [#allocation8], 256
    $region37: #{tpu_custom_call.1} parent=1 // pred_fallthru
      _
    // Predicated region
    $region38: #{tpu_custom_call.1} parent=1 // pred_check
      _
    $region39: #{tpu_custom_call.1} parent=1 // pred_check_branch
      %92 = sbr.rel (0) target = $region41
    $region40: #{tpu_custom_call.1} parent=1 // pred_region
      %93 = dma.done [#allocation11], 32
    $region41: #{tpu_custom_call.1} parent=1 // pred_fallthru
      _
    // Predicated region
    $region42: #{tpu_custom_call.1} parent=1 // pred_check
      _
    $region43: #{tpu_custom_call.1} parent=1 // pred_check_branch
      %95 = sbr.rel (0) target = $region45
    $region44: #{tpu_custom_call.1} parent=1 // pred_region
      %96 = dma.done [#allocation11], 32
    $region45: #{tpu_custom_call.1} parent=1 // pred_fallthru
      _
    // Predicated region
    $region46: #{tpu_custom_call.1} parent=1 // pred_check
      _
    $region47: #{tpu_custom_call.1} parent=1 // pred_check_branch
      %98 = sbr.rel (0) target = $region49
    $region48: #{tpu_custom_call.1} parent=1 // pred_region
      %99 = dma.done [#allocation14], 512
    $region49: #{tpu_custom_call.1} parent=1 // pred_fallthru
      _
    %s100 = smul.u32 0, 1024
    %s101 = smul.addr %s100, 64
    %s102 = scalar_lea.hbm %s6, %s101
    %s104 = sshll.u32 1, 14
    %s105 = sxor.u32 4294967295, %s104
    %s107 = sld [smem:[#allocation0]]
    %s108 = sadd.s32 2, %s107
    %s110 = sshll.u32 7, 26
    %s111 = sxor.u32 4294967295, %s110
    %s112 = sand.u32 0, %s111
    %s113 = sshll.u32 %s108, 26
    %s114 = sor.u32 %s112, %s113
    %s115 = sshll.u32 [#allocation2], 4
    %s116 = int_to_ptr.vmem [resolvable:$true] %s115
    %119 = sst [smem:[#allocation19]] 1024
    %s120 = scalar_lea.smem [#allocation19], 1
    %121 = sst [smem:[%s120]] 1024
    %s122 = scalar_lea.smem [#allocation19], 2
    %123 = sst [smem:[%s122]] 8
    %s124 = scalar_lea.smem [#allocation19], 3
    %125 = sst [smem:[%s124]] 64
    %s126 = scalar_lea.smem [#allocation19], 4
    %127 = sst [smem:[%s126]] 128
    %s128 = scalar_lea.smem [#allocation19], 5
    %129 = sst [smem:[%s128]] 2
    %s130 = scalar_lea.smem [#allocation19], 6
    %131 = sst [smem:[%s130]] 512
    %s132 = scalar_lea.smem [#allocation19], 7
    %133 = sst [smem:[%s132]] 64
    %s134 = scalar_lea.smem [#allocation19], 8
    %135 = sst [smem:[%s134]] 4
    %137 = dma.general %s102, 65536, %s116, [#allocation3], [#allocation18], [#allocation19], %s114, 0
    %v138 = vld [vmem:[#allocation4] sm:$0x3]
    %140 = vrot.lane.b32.xlu0 %v138, 127
    %v141 = vpop.permute.xlu0 %140
    %v143 = vrcp.pop %v141
    %v144 = vmul.f32 %v138, %v143
    %v145 = vld [vmem:[#allocation7] sm:$0xff]
    %v146 = vld [vmem:[#allocation7 + $0x8] sm:$0xff]
    %147 = vset.pattern.permute.xlu0 0
    %148 = vperm.xlu0 %147, %v138
    %v149 = vpop.permute.xlu0 %148
    %v153 = vcombine.high %v145, %v145
    %v155 = vunpack.c.l.s4 1983009808
    %v156 = vunpack.c.0.s8 %v155
    %v157 = vlaneseq
    %v158 = vshrl.u32 %v157, 7
    %v159 = vsub.s32 %v156, %v158
    %v160 = vrot.slane %v145, %v159
    %v162 = vunpack.c.l.s4 1983009808
    %v163 = vunpack.c.0.s8 %v162
    %v164 = vlaneseq
    %v165 = vshrl.u32 %v164, 7
    %v166 = vsub.s32 %v163, %v165
    %v167 = vrot.slane %v153, %v166
    %v168 = vcombine.high %v160, %v160
    %v169 = vcombine.high %v167, %v167
    %v170 = vcombine.high %v146, %v146
    %v172 = vunpack.c.l.s4 1983009808
    %v173 = vunpack.c.0.s8 %v172
    %v174 = vlaneseq
    %v175 = vshrl.u32 %v174, 7
    %v176 = vsub.s32 %v173, %v175
    %v177 = vrot.slane %v146, %v176
    %v179 = vunpack.c.l.s4 1983009808
    %v180 = vunpack.c.0.s8 %v179
    %v181 = vlaneseq
    %v182 = vshrl.u32 %v181, 7
    %v183 = vsub.s32 %v180, %v182
    %v184 = vrot.slane %v170, %v183
    %v185 = vcombine.high %v177, %v177
    %v186 = vcombine.high %v184, %v184
    %v195 = vmul.f32 %v149, %v160
    %v196 = vmul.f32 %v149, %v168
    %v197 = vmul.f32 %v149, %v167
    %v198 = vmul.f32 %v149, %v169
    %v199 = vmul.f32 %v149, %v177
    %v200 = vmul.f32 %v149, %v185
    %v201 = vmul.f32 %v149, %v184
    %v202 = vmul.f32 %v149, %v186
    %v203 = vld [vmem:[#allocation9] sm:$0xff]
    %v204 = vld [vmem:[#allocation9 + $0x8] sm:$0xff]
    %205 = vset.pattern.permute.xlu0 1
    %206 = vperm.xlu0 %205, %v138
    %v207 = vpop.permute.xlu0 %206
    %v211 = vcombine.high %v203, %v203
    %v213 = vunpack.c.l.s4 1983009808
    %v214 = vunpack.c.0.s8 %v213
    %v215 = vlaneseq
    %v216 = vshrl.u32 %v215, 7
    %v217 = vsub.s32 %v214, %v216
    %v218 = vrot.slane %v203, %v217
    %v220 = vunpack.c.l.s4 1983009808
    %v221 = vunpack.c.0.s8 %v220
    %v222 = vlaneseq
    %v223 = vshrl.u32 %v222, 7
    %v224 = vsub.s32 %v221, %v223
    %v225 = vrot.slane %v211, %v224
    %v226 = vcombine.high %v218, %v218
    %v227 = vcombine.high %v225, %v225
    %v228 = vcombine.high %v204, %v204
    %v230 = vunpack.c.l.s4 1983009808
    %v231 = vunpack.c.0.s8 %v230
    %v232 = vlaneseq
    %v233 = vshrl.u32 %v232, 7
    %v234 = vsub.s32 %v231, %v233
    %v235 = vrot.slane %v204, %v234
    %v237 = vunpack.c.l.s4 1983009808
    %v238 = vunpack.c.0.s8 %v237
    %v239 = vlaneseq
    %v240 = vshrl.u32 %v239, 7
    %v241 = vsub.s32 %v238, %v240
    %v242 = vrot.slane %v228, %v241
    %v243 = vcombine.high %v235, %v235
    %v244 = vcombine.high %v242, %v242
    %v253 = vmul.f32 %v207, %v218
    %v254 = vmul.f32 %v207, %v226
    %v255 = vmul.f32 %v207, %v225
    %v256 = vmul.f32 %v207, %v227
    %v257 = vmul.f32 %v207, %v235
    %v258 = vmul.f32 %v207, %v243
    %v259 = vmul.f32 %v207, %v242
    %v260 = vmul.f32 %v207, %v244
    %v261 = vadd.f32 %v195, %v253
    %v262 = vadd.f32 %v196, %v254
    %v263 = vadd.f32 %v197, %v255
    %v264 = vadd.f32 %v198, %v256
    %v265 = vadd.f32 %v199, %v257
    %v266 = vadd.f32 %v200, %v258
    %v267 = vadd.f32 %v201, %v259
    %v268 = vadd.f32 %v202, %v260
    %v269 = vpack.c.bf16 %v261, %v261
    %v270 = vpack.c.bf16 %v262, %v262
    %v271 = vpack.c.bf16 %v263, %v263
    %v272 = vpack.c.bf16 %v264, %v264
    %v273 = vpack.c.bf16 %v265, %v265
    %v274 = vpack.c.bf16 %v266, %v266
    %v275 = vpack.c.bf16 %v267, %v267
    %v276 = vpack.c.bf16 %v268, %v268
    %v277 = vld [vmem:[#allocation10] sm:$0x3]
    %v278 = vmul.f32 %v149, %v277
    %v279 = vld [vmem:[#allocation12] sm:$0x3]
    %v280 = vmul.f32 %v207, %v279
    %v281 = vadd.f32 %v278, %v280
    %v282 = vld [vmem:[#allocation13] sm:$0xff]
    %v283 = vld [vmem:[#allocation13 + $0x8] sm:$0xff]
    %v284 = vld [vmem:[#allocation13 + $0x10] sm:$0xff]
    %v285 = vld [vmem:[#allocation13 + $0x18] sm:$0xff]
    %vm286 = vcmask 261120
    %v288 = vsel %vm286, %v281, 0
    %290 = vmatprep.subr.mxu0 0.0
    %291 = vmatpush1.msra.mxu0 %v282
    %292 = vmatprep.subr.mxu0 0.0
    %293 = vmatpush1.msra.mxu0 %v283
    %294 = vmatprep.subr.mxu0 0.0
    %295 = vmatpush1.msra.mxu0 %v284
    %296 = vmatprep.subr.mxu0 0.0
    %297 = vmatpush1.msra.mxu0 %v285
    %298 = vmatprep.subr.mxu0 0.0
    %299 = vmatpush1.msra.mxu0 0.0
    %300 = vmatprep.subr.mxu0 0.0
    %301 = vmatpush1.msra.mxu0 0.0
    %302 = vmatprep.subr.mxu0 0.0
    %303 = vmatpush1.msra.mxu0 0.0
    %304 = vmatprep.subr.mxu0 0.0
    %305 = vmatpush1.msra.mxu0 0.0
    %306 = vmatprep.subr.mxu0 0.0
    %307 = vmatpush1.msra.mxu0 0.0
    %308 = vmatprep.subr.mxu0 0.0
    %309 = vmatpush1.msra.mxu0 0.0
    %310 = vmatprep.subr.mxu0 0.0
    %311 = vmatpush1.msra.mxu0 0.0
    %312 = vmatprep.subr.mxu0 0.0
    %313 = vmatpush1.msra.mxu0 0.0
    %314 = vmatprep.subr.mxu0 0.0
    %315 = vmatpush1.msra.mxu0 0.0
    %316 = vmatprep.subr.mxu0 0.0
    %317 = vmatpush1.msra.mxu0 0.0
    %318 = vmatprep.subr.mxu0 0.0
    %319 = vmatpush1.msra.mxu0 0.0
    %320 = vmatprep.subr.mxu0 0.0
    %321 = vmatpush1.msra.mxu0 0.0
    %322 = vmatprep.subr.mxu0 0.0
    %323 = vmatpush1.msra.mxu0 0.0
    %324 = vmatprep.subr.mxu0 0.0
    %325 = vmatpush1.msra.mxu0 0.0
    %326 = vmatprep.subr.mxu0 0.0
    %327 = vmatpush1.msra.mxu0 0.0
    %328 = vmatprep.subr.mxu0 0.0
    %329 = vmatpush1.msra.mxu0 0.0
    %330 = vmatprep.subr.mxu0 0.0
    %331 = vmatpush1.msra.mxu0 0.0
    %332 = vmatprep.subr.mxu0 0.0
    %333 = vmatpush1.msra.mxu0 0.0
    %334 = vmatprep.subr.mxu0 0.0
    %335 = vmatpush1.msra.mxu0 0.0
    %336 = vmatprep.subr.mxu0 0.0
    %337 = vmatpush1.msra.mxu0 0.0
    %338 = vmatprep.subr.mxu0 0.0
    %339 = vmatpush1.msra.mxu0 0.0
    %340 = vmatprep.subr.mxu0 0.0
    %341 = vmatpush1.msra.mxu0 0.0
    %342 = vmatprep.subr.mxu0 0.0
    %343 = vmatpush1.msra.mxu0 0.0
    %344 = vmatprep.subr.mxu0 0.0
    %345 = vmatpush1.msra.mxu0 0.0
    %346 = vmatprep.subr.mxu0 0.0
    %347 = vmatpush1.msra.mxu0 0.0
    %348 = vmatprep.subr.mxu0 0.0
    %349 = vmatpush1.msra.mxu0 0.0
    %350 = vmatprep.subr.mxu0 0.0
    %351 = vmatpush1.msra.mxu0 0.0
    %352 = vmatprep.subr.mxu0 0.0
    %353 = vmatpush1.msra.mxu0 0.0
    %354 = vmatprep.mubr.f32.mxu0 0.0
    %355 = vmatmul.mubr.f32.gmra.mrb[0].mxu0 %v288
    %v356 = vpop.f32.mrb[0].mxu0
    %v357 = vadd.f32 0.0, %v356
    %v358 = vpop.f32.mrb[0].mxu0
    %359 = vdwg.mxu0
    %v360 = vsub.f32 %v357, %v277
    %362 = vset.pattern.permute.xlu0 0
    %363 = vperm.xlu0 %362, %v144
    %v364 = vpop.permute.xlu0 %363
    %v366 = vmul.f32 %v360, %v364
    %v367 = vmul.f32 %v366, %v366
    %vm368 = vcmask 254976
    %v369 = vsel %vm368, %v367, 0.0
    %370 = vadd.xlane.f32.xlu0 %v369
    %v371 = vpop.xlane.xlu0 %370
    %v372 = vrot.slane %v371, 4
    %v373 = vadd.f32 %v371, %v372
    %v374 = vrot.slane %v373, 2
    %v375 = vadd.f32 %v373, %v374
    %v376 = vrot.slane %v375, 1
    %v377 = vadd.f32 %v375, %v376
    %s378 = vtos %v377
    %s379 = smul.f32 %s378, 0.015625
    %s380 = smul.u32 4, 128
    %s381 = smul.u32 %s380, 8
    %s382 = sshll.u32 %s381, 4
    %383 = dma.done [#allocation3], %s382
    %v384 = vld [vmem:[#allocation2] sm:$0xff]
    %v385 = vld [vmem:[#allocation2 + $0x8] sm:$0xff]
    %v386 = vld [vmem:[#allocation2 + $0x10] sm:$0xff]
    %v387 = vld [vmem:[#allocation2 + $0x18] sm:$0xff]
    %v388 = vld [vmem:[#allocation2 + $0x20] sm:$0xff]
    %v389 = vld [vmem:[#allocation2 + $0x28] sm:$0xff]
    %v390 = vld [vmem:[#allocation2 + $0x30] sm:$0xff]
    %v391 = vld [vmem:[#allocation2 + $0x38] sm:$0xff]
    %v392 = vld [vmem:[#allocation2 + $0x40] sm:$0xff]
    %v393 = vld [vmem:[#allocation2 + $0x48] sm:$0xff]
    %v394 = vld [vmem:[#allocation2 + $0x50] sm:$0xff]
    %v395 = vld [vmem:[#allocation2 + $0x58] sm:$0xff]
    %v396 = vld [vmem:[#allocation2 + $0x60] sm:$0xff]
    %v397 = vld [vmem:[#allocation2 + $0x68] sm:$0xff]
    %v398 = vld [vmem:[#allocation2 + $0x70] sm:$0xff]
    %v399 = vld [vmem:[#allocation2 + $0x78] sm:$0xff]
    %v400 = vld [vmem:[#allocation2 + $0x80] sm:$0xff]
    %v401 = vld [vmem:[#allocation2 + $0x88] sm:$0xff]
    %v402 = vld [vmem:[#allocation2 + $0x90] sm:$0xff]
    %v403 = vld [vmem:[#allocation2 + $0x98] sm:$0xff]
    %v404 = vld [vmem:[#allocation2 + $0xa0] sm:$0xff]
    %v405 = vld [vmem:[#allocation2 + $0xa8] sm:$0xff]
    %v406 = vld [vmem:[#allocation2 + $0xb0] sm:$0xff]
    %v407 = vld [vmem:[#allocation2 + $0xb8] sm:$0xff]
    %v408 = vld [vmem:[#allocation2 + $0xc0] sm:$0xff]
    %v409 = vld [vmem:[#allocation2 + $0xc8] sm:$0xff]
    %v410 = vld [vmem:[#allocation2 + $0xd0] sm:$0xff]
    %v411 = vld [vmem:[#allocation2 + $0xd8] sm:$0xff]
    %v412 = vld [vmem:[#allocation2 + $0xe0] sm:$0xff]
    %v413 = vld [vmem:[#allocation2 + $0xe8] sm:$0xff]
    %v414 = vld [vmem:[#allocation2 + $0xf0] sm:$0xff]
    %v415 = vld [vmem:[#allocation2 + $0xf8] sm:$0xff]
    %v416 = vld [vmem:[#allocation2 + $0x100] sm:$0xff]
    %v417 = vld [vmem:[#allocation2 + $0x108] sm:$0xff]
    %v418 = vld [vmem:[#allocation2 + $0x110] sm:$0xff]
    %v419 = vld [vmem:[#allocation2 + $0x118] sm:$0xff]
    %v420 = vld [vmem:[#allocation2 + $0x120] sm:$0xff]
    %v421 = vld [vmem:[#allocation2 + $0x128] sm:$0xff]
    %v422 = vld [vmem:[#allocation2 + $0x130] sm:$0xff]
    %v423 = vld [vmem:[#allocation2 + $0x138] sm:$0xff]
    %v424 = vld [vmem:[#allocation2 + $0x140] sm:$0xff]
    %v425 = vld [vmem:[#allocation2 + $0x148] sm:$0xff]
    %v426 = vld [vmem:[#allocation2 + $0x150] sm:$0xff]
    %v427 = vld [vmem:[#allocation2 + $0x158] sm:$0xff]
    %v428 = vld [vmem:[#allocation2 + $0x160] sm:$0xff]
    %v429 = vld [vmem:[#allocation2 + $0x168] sm:$0xff]
    %v430 = vld [vmem:[#allocation2 + $0x170] sm:$0xff]
    %v431 = vld [vmem:[#allocation2 + $0x178] sm:$0xff]
    %v432 = vld [vmem:[#allocation2 + $0x180] sm:$0xff]
    %v433 = vld [vmem:[#allocation2 + $0x188] sm:$0xff]
    %v434 = vld [vmem:[#allocation2 + $0x190] sm:$0xff]
    %v435 = vld [vmem:[#allocation2 + $0x198] sm:$0xff]
    %v436 = vld [vmem:[#allocation2 + $0x1a0] sm:$0xff]
    %v437 = vld [vmem:[#allocation2 + $0x1a8] sm:$0xff]
    %v438 = vld [vmem:[#allocation2 + $0x1b0] sm:$0xff]
    %v439 = vld [vmem:[#allocation2 + $0x1b8] sm:$0xff]
    %v440 = vld [vmem:[#allocation2 + $0x1c0] sm:$0xff]
    %v441 = vld [vmem:[#allocation2 + $0x1c8] sm:$0xff]
    %v442 = vld [vmem:[#allocation2 + $0x1d0] sm:$0xff]
    %v443 = vld [vmem:[#allocation2 + $0x1d8] sm:$0xff]
    %v444 = vld [vmem:[#allocation2 + $0x1e0] sm:$0xff]
    %v445 = vld [vmem:[#allocation2 + $0x1e8] sm:$0xff]
    %v446 = vld [vmem:[#allocation2 + $0x1f0] sm:$0xff]
    %v447 = vld [vmem:[#allocation2 + $0x1f8] sm:$0xff]
    %v448 = vld [vmem:[#allocation2 + $0x200] sm:$0xff]
    %v449 = vld [vmem:[#allocation2 + $0x208] sm:$0xff]
    %v450 = vld [vmem:[#allocation2 + $0x210] sm:$0xff]
    %v451 = vld [vmem:[#allocation2 + $0x218] sm:$0xff]
    %v452 = vld [vmem:[#allocation2 + $0x220] sm:$0xff]
    %v453 = vld [vmem:[#allocation2 + $0x228] sm:$0xff]
    %v454 = vld [vmem:[#allocation2 + $0x230] sm:$0xff]
    %v455 = vld [vmem:[#allocation2 + $0x238] sm:$0xff]
    %v456 = vld [vmem:[#allocation2 + $0x240] sm:$0xff]
    %v457 = vld [vmem:[#allocation2 + $0x248] sm:$0xff]
    %v458 = vld [vmem:[#allocation2 + $0x250] sm:$0xff]
    %v459 = vld [vmem:[#allocation2 + $0x258] sm:$0xff]
    %v460 = vld [vmem:[#allocation2 + $0x260] sm:$0xff]
    %v461 = vld [vmem:[#allocation2 + $0x268] sm:$0xff]
    %v462 = vld [vmem:[#allocation2 + $0x270] sm:$0xff]
    %v463 = vld [vmem:[#allocation2 + $0x278] sm:$0xff]
    %v464 = vld [vmem:[#allocation2 + $0x280] sm:$0xff]
    %v465 = vld [vmem:[#allocation2 + $0x288] sm:$0xff]
    %v466 = vld [vmem:[#allocation2 + $0x290] sm:$0xff]
    %v467 = vld [vmem:[#allocation2 + $0x298] sm:$0xff]
    %v468 = vld [vmem:[#allocation2 + $0x2a0] sm:$0xff]
    %v469 = vld [vmem:[#allocation2 + $0x2a8] sm:$0xff]
    %v470 = vld [vmem:[#allocation2 + $0x2b0] sm:$0xff]
    %v471 = vld [vmem:[#allocation2 + $0x2b8] sm:$0xff]
    %v472 = vld [vmem:[#allocation2 + $0x2c0] sm:$0xff]
    %v473 = vld [vmem:[#allocation2 + $0x2c8] sm:$0xff]
    %v474 = vld [vmem:[#allocation2 + $0x2d0] sm:$0xff]
    %v475 = vld [vmem:[#allocation2 + $0x2d8] sm:$0xff]
    %v476 = vld [vmem:[#allocation2 + $0x2e0] sm:$0xff]
    %v477 = vld [vmem:[#allocation2 + $0x2e8] sm:$0xff]
    %v478 = vld [vmem:[#allocation2 + $0x2f0] sm:$0xff]
    %v479 = vld [vmem:[#allocation2 + $0x2f8] sm:$0xff]
    %v480 = vld [vmem:[#allocation2 + $0x300] sm:$0xff]
    %v481 = vld [vmem:[#allocation2 + $0x308] sm:$0xff]
    %v482 = vld [vmem:[#allocation2 + $0x310] sm:$0xff]
    %v483 = vld [vmem:[#allocation2 + $0x318] sm:$0xff]
    %v484 = vld [vmem:[#allocation2 + $0x320] sm:$0xff]
    %v485 = vld [vmem:[#allocation2 + $0x328] sm:$0xff]
    %v486 = vld [vmem:[#allocation2 + $0x330] sm:$0xff]
    %v487 = vld [vmem:[#allocation2 + $0x338] sm:$0xff]
    %v488 = vld [vmem:[#allocation2 + $0x340] sm:$0xff]
    %v489 = vld [vmem:[#allocation2 + $0x348] sm:$0xff]
    %v490 = vld [vmem:[#allocation2 + $0x350] sm:$0xff]
    %v491 = vld [vmem:[#allocation2 + $0x358] sm:$0xff]
    %v492 = vld [vmem:[#allocation2 + $0x360] sm:$0xff]
    %v493 = vld [vmem:[#allocation2 + $0x368] sm:$0xff]
    %v494 = vld [vmem:[#allocation2 + $0x370] sm:$0xff]
    %v495 = vld [vmem:[#allocation2 + $0x378] sm:$0xff]
    %v496 = vld [vmem:[#allocation2 + $0x380] sm:$0xff]
    %v497 = vld [vmem:[#allocation2 + $0x388] sm:$0xff]
    %v498 = vld [vmem:[#allocation2 + $0x390] sm:$0xff]
    %v499 = vld [vmem:[#allocation2 + $0x398] sm:$0xff]
    %v500 = vld [vmem:[#allocation2 + $0x3a0] sm:$0xff]
    %v501 = vld [vmem:[#allocation2 + $0x3a8] sm:$0xff]
    %v502 = vld [vmem:[#allocation2 + $0x3b0] sm:$0xff]
    %v503 = vld [vmem:[#allocation2 + $0x3b8] sm:$0xff]
    %v504 = vld [vmem:[#allocation2 + $0x3c0] sm:$0xff]
    %v505 = vld [vmem:[#allocation2 + $0x3c8] sm:$0xff]
    %v506 = vld [vmem:[#allocation2 + $0x3d0] sm:$0xff]
    %v507 = vld [vmem:[#allocation2 + $0x3d8] sm:$0xff]
    %v508 = vld [vmem:[#allocation2 + $0x3e0] sm:$0xff]
    %v509 = vld [vmem:[#allocation2 + $0x3e8] sm:$0xff]
    %v510 = vld [vmem:[#allocation2 + $0x3f0] sm:$0xff]
    %v511 = vld [vmem:[#allocation2 + $0x3f8] sm:$0xff]
    %v512 = vld [vmem:[#allocation2 + $0x400] sm:$0xff]
    %v513 = vld [vmem:[#allocation2 + $0x408] sm:$0xff]
    %v514 = vld [vmem:[#allocation2 + $0x410] sm:$0xff]
    %v515 = vld [vmem:[#allocation2 + $0x418] sm:$0xff]
    %v516 = vld [vmem:[#allocation2 + $0x420] sm:$0xff]
    %v517 = vld [vmem:[#allocation2 + $0x428] sm:$0xff]
    %v518 = vld [vmem:[#allocation2 + $0x430] sm:$0xff]
    %v519 = vld [vmem:[#allocation2 + $0x438] sm:$0xff]
    %v520 = vld [vmem:[#allocation2 + $0x440] sm:$0xff]
    %v521 = vld [vmem:[#allocation2 + $0x448] sm:$0xff]
    %v522 = vld [vmem:[#allocation2 + $0x450] sm:$0xff]
    %v523 = vld [vmem:[#allocation2 + $0x458] sm:$0xff]
    %v524 = vld [vmem:[#allocation2 + $0x460] sm:$0xff]
    %v525 = vld [vmem:[#allocation2 + $0x468] sm:$0xff]
    %v526 = vld [vmem:[#allocation2 + $0x470] sm:$0xff]
    %v527 = vld [vmem:[#allocation2 + $0x478] sm:$0xff]
    %v528 = vld [vmem:[#allocation2 + $0x480] sm:$0xff]
    %v529 = vld [vmem:[#allocation2 + $0x488] sm:$0xff]
    %v530 = vld [vmem:[#allocation2 + $0x490] sm:$0xff]
    %v531 = vld [vmem:[#allocation2 + $0x498] sm:$0xff]
    %v532 = vld [vmem:[#allocation2 + $0x4a0] sm:$0xff]
    %v533 = vld [vmem:[#allocation2 + $0x4a8] sm:$0xff]
    %v534 = vld [vmem:[#allocation2 + $0x4b0] sm:$0xff]
    %v535 = vld [vmem:[#allocation2 + $0x4b8] sm:$0xff]
    %v536 = vld [vmem:[#allocation2 + $0x4c0] sm:$0xff]
    %v537 = vld [vmem:[#allocation2 + $0x4c8] sm:$0xff]
    %v538 = vld [vmem:[#allocation2 + $0x4d0] sm:$0xff]
    %v539 = vld [vmem:[#allocation2 + $0x4d8] sm:$0xff]
    %v540 = vld [vmem:[#allocation2 + $0x4e0] sm:$0xff]
    %v541 = vld [vmem:[#allocation2 + $0x4e8] sm:$0xff]
    %v542 = vld [vmem:[#allocation2 + $0x4f0] sm:$0xff]
    %v543 = vld [vmem:[#allocation2 + $0x4f8] sm:$0xff]
    %v544 = vld [vmem:[#allocation2 + $0x500] sm:$0xff]
    %v545 = vld [vmem:[#allocation2 + $0x508] sm:$0xff]
    %v546 = vld [vmem:[#allocation2 + $0x510] sm:$0xff]
    %v547 = vld [vmem:[#allocation2 + $0x518] sm:$0xff]
    %v548 = vld [vmem:[#allocation2 + $0x520] sm:$0xff]
    %v549 = vld [vmem:[#allocation2 + $0x528] sm:$0xff]
    %v550 = vld [vmem:[#allocation2 + $0x530] sm:$0xff]
    %v551 = vld [vmem:[#allocation2 + $0x538] sm:$0xff]
    %v552 = vld [vmem:[#allocation2 + $0x540] sm:$0xff]
    %v553 = vld [vmem:[#allocation2 + $0x548] sm:$0xff]
    %v554 = vld [vmem:[#allocation2 + $0x550] sm:$0xff]
    %v555 = vld [vmem:[#allocation2 + $0x558] sm:$0xff]
    %v556 = vld [vmem:[#allocation2 + $0x560] sm:$0xff]
    %v557 = vld [vmem:[#allocation2 + $0x568] sm:$0xff]
    %v558 = vld [vmem:[#allocation2 + $0x570] sm:$0xff]
    %v559 = vld [vmem:[#allocation2 + $0x578] sm:$0xff]
    %v560 = vld [vmem:[#allocation2 + $0x580] sm:$0xff]
    %v561 = vld [vmem:[#allocation2 + $0x588] sm:$0xff]
    %v562 = vld [vmem:[#allocation2 + $0x590] sm:$0xff]
    %v563 = vld [vmem:[#allocation2 + $0x598] sm:$0xff]
    %v564 = vld [vmem:[#allocation2 + $0x5a0] sm:$0xff]
    %v565 = vld [vmem:[#allocation2 + $0x5a8] sm:$0xff]
    %v566 = vld [vmem:[#allocation2 + $0x5b0] sm:$0xff]
    %v567 = vld [vmem:[#allocation2 + $0x5b8] sm:$0xff]
    %v568 = vld [vmem:[#allocation2 + $0x5c0] sm:$0xff]
    %v569 = vld [vmem:[#allocation2 + $0x5c8] sm:$0xff]
    %v570 = vld [vmem:[#allocation2 + $0x5d0] sm:$0xff]
    %v571 = vld [vmem:[#allocation2 + $0x5d8] sm:$0xff]
    %v572 = vld [vmem:[#allocation2 + $0x5e0] sm:$0xff]
    %v573 = vld [vmem:[#allocation2 + $0x5e8] sm:$0xff]
    %v574 = vld [vmem:[#allocation2 + $0x5f0] sm:$0xff]
    %v575 = vld [vmem:[#allocation2 + $0x5f8] sm:$0xff]
    %v576 = vld [vmem:[#allocation2 + $0x600] sm:$0xff]
    %v577 = vld [vmem:[#allocation2 + $0x608] sm:$0xff]
    %v578 = vld [vmem:[#allocation2 + $0x610] sm:$0xff]
    %v579 = vld [vmem:[#allocation2 + $0x618] sm:$0xff]
    %v580 = vld [vmem:[#allocation2 + $0x620] sm:$0xff]
    %v581 = vld [vmem:[#allocation2 + $0x628] sm:$0xff]
    %v582 = vld [vmem:[#allocation2 + $0x630] sm:$0xff]
    %v583 = vld [vmem:[#allocation2 + $0x638] sm:$0xff]
    %v584 = vld [vmem:[#allocation2 + $0x640] sm:$0xff]
    %v585 = vld [vmem:[#allocation2 + $0x648] sm:$0xff]
    %v586 = vld [vmem:[#allocation2 + $0x650] sm:$0xff]
    %v587 = vld [vmem:[#allocation2 + $0x658] sm:$0xff]
    %v588 = vld [vmem:[#allocation2 + $0x660] sm:$0xff]
    %v589 = vld [vmem:[#allocation2 + $0x668] sm:$0xff]
    %v590 = vld [vmem:[#allocation2 + $0x670] sm:$0xff]
    %v591 = vld [vmem:[#allocation2 + $0x678] sm:$0xff]
    %v592 = vld [vmem:[#allocation2 + $0x680] sm:$0xff]
    %v593 = vld [vmem:[#allocation2 + $0x688] sm:$0xff]
    %v594 = vld [vmem:[#allocation2 + $0x690] sm:$0xff]
    %v595 = vld [vmem:[#allocation2 + $0x698] sm:$0xff]
    %v596 = vld [vmem:[#allocation2 + $0x6a0] sm:$0xff]
    %v597 = vld [vmem:[#allocation2 + $0x6a8] sm:$0xff]
    %v598 = vld [vmem:[#allocation2 + $0x6b0] sm:$0xff]
    %v599 = vld [vmem:[#allocation2 + $0x6b8] sm:$0xff]
    %v600 = vld [vmem:[#allocation2 + $0x6c0] sm:$0xff]
    %v601 = vld [vmem:[#allocation2 + $0x6c8] sm:$0xff]
    %v602 = vld [vmem:[#allocation2 + $0x6d0] sm:$0xff]
    %v603 = vld [vmem:[#allocation2 + $0x6d8] sm:$0xff]
    %v604 = vld [vmem:[#allocation2 + $0x6e0] sm:$0xff]
    %v605 = vld [vmem:[#allocation2 + $0x6e8] sm:$0xff]
    %v606 = vld [vmem:[#allocation2 + $0x6f0] sm:$0xff]
    %v607 = vld [vmem:[#allocation2 + $0x6f8] sm:$0xff]
    %v608 = vld [vmem:[#allocation2 + $0x700] sm:$0xff]
    %v609 = vld [vmem:[#allocation2 + $0x708] sm:$0xff]
    %v610 = vld [vmem:[#allocation2 + $0x710] sm:$0xff]
    %v611 = vld [vmem:[#allocation2 + $0x718] sm:$0xff]
    %v612 = vld [vmem:[#allocation2 + $0x720] sm:$0xff]
    %v613 = vld [vmem:[#allocation2 + $0x728] sm:$0xff]
    %v614 = vld [vmem:[#allocation2 + $0x730] sm:$0xff]
    %v615 = vld [vmem:[#allocation2 + $0x738] sm:$0xff]
    %v616 = vld [vmem:[#allocation2 + $0x740] sm:$0xff]
    %v617 = vld [vmem:[#allocation2 + $0x748] sm:$0xff]
    %v618 = vld [vmem:[#allocation2 + $0x750] sm:$0xff]
    %v619 = vld [vmem:[#allocation2 + $0x758] sm:$0xff]
    %v620 = vld [vmem:[#allocation2 + $0x760] sm:$0xff]
    %v621 = vld [vmem:[#allocation2 + $0x768] sm:$0xff]
    %v622 = vld [vmem:[#allocation2 + $0x770] sm:$0xff]
    %v623 = vld [vmem:[#allocation2 + $0x778] sm:$0xff]
    %v624 = vld [vmem:[#allocation2 + $0x780] sm:$0xff]
    %v625 = vld [vmem:[#allocation2 + $0x788] sm:$0xff]
    %v626 = vld [vmem:[#allocation2 + $0x790] sm:$0xff]
    %v627 = vld [vmem:[#allocation2 + $0x798] sm:$0xff]
    %v628 = vld [vmem:[#allocation2 + $0x7a0] sm:$0xff]
    %v629 = vld [vmem:[#allocation2 + $0x7a8] sm:$0xff]
    %v630 = vld [vmem:[#allocation2 + $0x7b0] sm:$0xff]
    %v631 = vld [vmem:[#allocation2 + $0x7b8] sm:$0xff]
    %v632 = vld [vmem:[#allocation2 + $0x7c0] sm:$0xff]
    %v633 = vld [vmem:[#allocation2 + $0x7c8] sm:$0xff]
    %v634 = vld [vmem:[#allocation2 + $0x7d0] sm:$0xff]
    %v635 = vld [vmem:[#allocation2 + $0x7d8] sm:$0xff]
    %v636 = vld [vmem:[#allocation2 + $0x7e0] sm:$0xff]
    %v637 = vld [vmem:[#allocation2 + $0x7e8] sm:$0xff]
    %v638 = vld [vmem:[#allocation2 + $0x7f0] sm:$0xff]
    %v639 = vld [vmem:[#allocation2 + $0x7f8] sm:$0xff]
    %v640 = vld [vmem:[#allocation2 + $0x800] sm:$0xff]
    %v641 = vld [vmem:[#allocation2 + $0x808] sm:$0xff]
    %v642 = vld [vmem:[#allocation2 + $0x810] sm:$0xff]
    %v643 = vld [vmem:[#allocation2 + $0x818] sm:$0xff]
    %v644 = vld [vmem:[#allocation2 + $0x820] sm:$0xff]
    %v645 = vld [vmem:[#allocation2 + $0x828] sm:$0xff]
    %v646 = vld [vmem:[#allocation2 + $0x830] sm:$0xff]
    %v647 = vld [vmem:[#allocation2 + $0x838] sm:$0xff]
    %v648 = vld [vmem:[#allocation2 + $0x840] sm:$0xff]
    %v649 = vld [vmem:[#allocation2 + $0x848] sm:$0xff]
    %v650 = vld [vmem:[#allocation2 + $0x850] sm:$0xff]
    %v651 = vld [vmem:[#allocation2 + $0x858] sm:$0xff]
    %v652 = vld [vmem:[#allocation2 + $0x860] sm:$0xff]
    %v653 = vld [vmem:[#allocation2 + $0x868] sm:$0xff]
    %v654 = vld [vmem:[#allocation2 + $0x870] sm:$0xff]
    %v655 = vld [vmem:[#allocation2 + $0x878] sm:$0xff]
    %v656 = vld [vmem:[#allocation2 + $0x880] sm:$0xff]
    %v657 = vld [vmem:[#allocation2 + $0x888] sm:$0xff]
    %v658 = vld [vmem:[#allocation2 + $0x890] sm:$0xff]
    %v659 = vld [vmem:[#allocation2 + $0x898] sm:$0xff]
    %v660 = vld [vmem:[#allocation2 + $0x8a0] sm:$0xff]
    %v661 = vld [vmem:[#allocation2 + $0x8a8] sm:$0xff]
    %v662 = vld [vmem:[#allocation2 + $0x8b0] sm:$0xff]
    %v663 = vld [vmem:[#allocation2 + $0x8b8] sm:$0xff]
    %v664 = vld [vmem:[#allocation2 + $0x8c0] sm:$0xff]
    %v665 = vld [vmem:[#allocation2 + $0x8c8] sm:$0xff]
    %v666 = vld [vmem:[#allocation2 + $0x8d0] sm:$0xff]
    %v667 = vld [vmem:[#allocation2 + $0x8d8] sm:$0xff]
    %v668 = vld [vmem:[#allocation2 + $0x8e0] sm:$0xff]
    %v669 = vld [vmem:[#allocation2 + $0x8e8] sm:$0xff]
    %v670 = vld [vmem:[#allocation2 + $0x8f0] sm:$0xff]
    %v671 = vld [vmem:[#allocation2 + $0x8f8] sm:$0xff]
    %v672 = vld [vmem:[#allocation2 + $0x900] sm:$0xff]
    %v673 = vld [vmem:[#allocation2 + $0x908] sm:$0xff]
    %v674 = vld [vmem:[#allocation2 + $0x910] sm:$0xff]
    %v675 = vld [vmem:[#allocation2 + $0x918] sm:$0xff]
    %v676 = vld [vmem:[#allocation2 + $0x920] sm:$0xff]
    %v677 = vld [vmem:[#allocation2 + $0x928] sm:$0xff]
    %v678 = vld [vmem:[#allocation2 + $0x930] sm:$0xff]
    %v679 = vld [vmem:[#allocation2 + $0x938] sm:$0xff]
    %v680 = vld [vmem:[#allocation2 + $0x940] sm:$0xff]
    %v681 = vld [vmem:[#allocation2 + $0x948] sm:$0xff]
    %v682 = vld [vmem:[#allocation2 + $0x950] sm:$0xff]
    %v683 = vld [vmem:[#allocation2 + $0x958] sm:$0xff]
    %v684 = vld [vmem:[#allocation2 + $0x960] sm:$0xff]
    %v685 = vld [vmem:[#allocation2 + $0x968] sm:$0xff]
    %v686 = vld [vmem:[#allocation2 + $0x970] sm:$0xff]
    %v687 = vld [vmem:[#allocation2 + $0x978] sm:$0xff]
    %v688 = vld [vmem:[#allocation2 + $0x980] sm:$0xff]
    %v689 = vld [vmem:[#allocation2 + $0x988] sm:$0xff]
    %v690 = vld [vmem:[#allocation2 + $0x990] sm:$0xff]
    %v691 = vld [vmem:[#allocation2 + $0x998] sm:$0xff]
    %v692 = vld [vmem:[#allocation2 + $0x9a0] sm:$0xff]
    %v693 = vld [vmem:[#allocation2 + $0x9a8] sm:$0xff]
    %v694 = vld [vmem:[#allocation2 + $0x9b0] sm:$0xff]
    %v695 = vld [vmem:[#allocation2 + $0x9b8] sm:$0xff]
    %v696 = vld [vmem:[#allocation2 + $0x9c0] sm:$0xff]
    %v697 = vld [vmem:[#allocation2 + $0x9c8] sm:$0xff]
    %v698 = vld [vmem:[#allocation2 + $0x9d0] sm:$0xff]
    %v699 = vld [vmem:[#allocation2 + $0x9d8] sm:$0xff]
    %v700 = vld [vmem:[#allocation2 + $0x9e0] sm:$0xff]
    %v701 = vld [vmem:[#allocation2 + $0x9e8] sm:$0xff]
    %v702 = vld [vmem:[#allocation2 + $0x9f0] sm:$0xff]
    %v703 = vld [vmem:[#allocation2 + $0x9f8] sm:$0xff]
    %v704 = vld [vmem:[#allocation2 + $0xa00] sm:$0xff]
    %v705 = vld [vmem:[#allocation2 + $0xa08] sm:$0xff]
    %v706 = vld [vmem:[#allocation2 + $0xa10] sm:$0xff]
    %v707 = vld [vmem:[#allocation2 + $0xa18] sm:$0xff]
    %v708 = vld [vmem:[#allocation2 + $0xa20] sm:$0xff]
    %v709 = vld [vmem:[#allocation2 + $0xa28] sm:$0xff]
    %v710 = vld [vmem:[#allocation2 + $0xa30] sm:$0xff]
    %v711 = vld [vmem:[#allocation2 + $0xa38] sm:$0xff]
    %v712 = vld [vmem:[#allocation2 + $0xa40] sm:$0xff]
    %v713 = vld [vmem:[#allocation2 + $0xa48] sm:$0xff]
    %v714 = vld [vmem:[#allocation2 + $0xa50] sm:$0xff]
    %v715 = vld [vmem:[#allocation2 + $0xa58] sm:$0xff]
    %v716 = vld [vmem:[#allocation2 + $0xa60] sm:$0xff]
    %v717 = vld [vmem:[#allocation2 + $0xa68] sm:$0xff]
    %v718 = vld [vmem:[#allocation2 + $0xa70] sm:$0xff]
    %v719 = vld [vmem:[#allocation2 + $0xa78] sm:$0xff]
    %v720 = vld [vmem:[#allocation2 + $0xa80] sm:$0xff]
    %v721 = vld [vmem:[#allocation2 + $0xa88] sm:$0xff]
    %v722 = vld [vmem:[#allocation2 + $0xa90] sm:$0xff]
    %v723 = vld [vmem:[#allocation2 + $0xa98] sm:$0xff]
    %v724 = vld [vmem:[#allocation2 + $0xaa0] sm:$0xff]
    %v725 = vld [vmem:[#allocation2 + $0xaa8] sm:$0xff]
    %v726 = vld [vmem:[#allocation2 + $0xab0] sm:$0xff]
    %v727 = vld [vmem:[#allocation2 + $0xab8] sm:$0xff]
    %v728 = vld [vmem:[#allocation2 + $0xac0] sm:$0xff]
    %v729 = vld [vmem:[#allocation2 + $0xac8] sm:$0xff]
    %v730 = vld [vmem:[#allocation2 + $0xad0] sm:$0xff]
    %v731 = vld [vmem:[#allocation2 + $0xad8] sm:$0xff]
    %v732 = vld [vmem:[#allocation2 + $0xae0] sm:$0xff]
    %v733 = vld [vmem:[#allocation2 + $0xae8] sm:$0xff]
    %v734 = vld [vmem:[#allocation2 + $0xaf0] sm:$0xff]
    %v735 = vld [vmem:[#allocation2 + $0xaf8] sm:$0xff]
    %v736 = vld [vmem:[#allocation2 + $0xb00] sm:$0xff]
    %v737 = vld [vmem:[#allocation2 + $0xb08] sm:$0xff]
    %v738 = vld [vmem:[#allocation2 + $0xb10] sm:$0xff]
    %v739 = vld [vmem:[#allocation2 + $0xb18] sm:$0xff]
    %v740 = vld [vmem:[#allocation2 + $0xb20] sm:$0xff]
    %v741 = vld [vmem:[#allocation2 + $0xb28] sm:$0xff]
    %v742 = vld [vmem:[#allocation2 + $0xb30] sm:$0xff]
    %v743 = vld [vmem:[#allocation2 + $0xb38] sm:$0xff]
    %v744 = vld [vmem:[#allocation2 + $0xb40] sm:$0xff]
    %v745 = vld [vmem:[#allocation2 + $0xb48] sm:$0xff]
    %v746 = vld [vmem:[#allocation2 + $0xb50] sm:$0xff]
    %v747 = vld [vmem:[#allocation2 + $0xb58] sm:$0xff]
    %v748 = vld [vmem:[#allocation2 + $0xb60] sm:$0xff]
    %v749 = vld [vmem:[#allocation2 + $0xb68] sm:$0xff]
    %v750 = vld [vmem:[#allocation2 + $0xb70] sm:$0xff]
    %v751 = vld [vmem:[#allocation2 + $0xb78] sm:$0xff]
    %v752 = vld [vmem:[#allocation2 + $0xb80] sm:$0xff]
    %v753 = vld [vmem:[#allocation2 + $0xb88] sm:$0xff]
    %v754 = vld [vmem:[#allocation2 + $0xb90] sm:$0xff]
    %v755 = vld [vmem:[#allocation2 + $0xb98] sm:$0xff]
    %v756 = vld [vmem:[#allocation2 + $0xba0] sm:$0xff]
    %v757 = vld [vmem:[#allocation2 + $0xba8] sm:$0xff]
    %v758 = vld [vmem:[#allocation2 + $0xbb0] sm:$0xff]
    %v759 = vld [vmem:[#allocation2 + $0xbb8] sm:$0xff]
    %v760 = vld [vmem:[#allocation2 + $0xbc0] sm:$0xff]
    %v761 = vld [vmem:[#allocation2 + $0xbc8] sm:$0xff]
    %v762 = vld [vmem:[#allocation2 + $0xbd0] sm:$0xff]
    %v763 = vld [vmem:[#allocation2 + $0xbd8] sm:$0xff]
    %v764 = vld [vmem:[#allocation2 + $0xbe0] sm:$0xff]
    %v765 = vld [vmem:[#allocation2 + $0xbe8] sm:$0xff]
    %v766 = vld [vmem:[#allocation2 + $0xbf0] sm:$0xff]
    %v767 = vld [vmem:[#allocation2 + $0xbf8] sm:$0xff]
    %v768 = vld [vmem:[#allocation2 + $0xc00] sm:$0xff]
    %v769 = vld [vmem:[#allocation2 + $0xc08] sm:$0xff]
    %v770 = vld [vmem:[#allocation2 + $0xc10] sm:$0xff]
    %v771 = vld [vmem:[#allocation2 + $0xc18] sm:$0xff]
    %v772 = vld [vmem:[#allocation2 + $0xc20] sm:$0xff]
    %v773 = vld [vmem:[#allocation2 + $0xc28] sm:$0xff]
    %v774 = vld [vmem:[#allocation2 + $0xc30] sm:$0xff]
    %v775 = vld [vmem:[#allocation2 + $0xc38] sm:$0xff]
    %v776 = vld [vmem:[#allocation2 + $0xc40] sm:$0xff]
    %v777 = vld [vmem:[#allocation2 + $0xc48] sm:$0xff]
    %v778 = vld [vmem:[#allocation2 + $0xc50] sm:$0xff]
    %v779 = vld [vmem:[#allocation2 + $0xc58] sm:$0xff]
    %v780 = vld [vmem:[#allocation2 + $0xc60] sm:$0xff]
    %v781 = vld [vmem:[#allocation2 + $0xc68] sm:$0xff]
    %v782 = vld [vmem:[#allocation2 + $0xc70] sm:$0xff]
    %v783 = vld [vmem:[#allocation2 + $0xc78] sm:$0xff]
    %v784 = vld [vmem:[#allocation2 + $0xc80] sm:$0xff]
    %v785 = vld [vmem:[#allocation2 + $0xc88] sm:$0xff]
    %v786 = vld [vmem:[#allocation2 + $0xc90] sm:$0xff]
    %v787 = vld [vmem:[#allocation2 + $0xc98] sm:$0xff]
    %v788 = vld [vmem:[#allocation2 + $0xca0] sm:$0xff]
    %v789 = vld [vmem:[#allocation2 + $0xca8] sm:$0xff]
    %v790 = vld [vmem:[#allocation2 + $0xcb0] sm:$0xff]
    %v791 = vld [vmem:[#allocation2 + $0xcb8] sm:$0xff]
    %v792 = vld [vmem:[#allocation2 + $0xcc0] sm:$0xff]
    %v793 = vld [vmem:[#allocation2 + $0xcc8] sm:$0xff]
    %v794 = vld [vmem:[#allocation2 + $0xcd0] sm:$0xff]
    %v795 = vld [vmem:[#allocation2 + $0xcd8] sm:$0xff]
    %v796 = vld [vmem:[#allocation2 + $0xce0] sm:$0xff]
    %v797 = vld [vmem:[#allocation2 + $0xce8] sm:$0xff]
    %v798 = vld [vmem:[#allocation2 + $0xcf0] sm:$0xff]
    %v799 = vld [vmem:[#allocation2 + $0xcf8] sm:$0xff]
    %v800 = vld [vmem:[#allocation2 + $0xd00] sm:$0xff]
    %v801 = vld [vmem:[#allocation2 + $0xd08] sm:$0xff]
    %v802 = vld [vmem:[#allocation2 + $0xd10] sm:$0xff]
    %v803 = vld [vmem:[#allocation2 + $0xd18] sm:$0xff]
    %v804 = vld [vmem:[#allocation2 + $0xd20] sm:$0xff]
    %v805 = vld [vmem:[#allocation2 + $0xd28] sm:$0xff]
    %v806 = vld [vmem:[#allocation2 + $0xd30] sm:$0xff]
    %v807 = vld [vmem:[#allocation2 + $0xd38] sm:$0xff]
    %v808 = vld [vmem:[#allocation2 + $0xd40] sm:$0xff]
    %v809 = vld [vmem:[#allocation2 + $0xd48] sm:$0xff]
    %v810 = vld [vmem:[#allocation2 + $0xd50] sm:$0xff]
    %v811 = vld [vmem:[#allocation2 + $0xd58] sm:$0xff]
    %v812 = vld [vmem:[#allocation2 + $0xd60] sm:$0xff]
    %v813 = vld [vmem:[#allocation2 + $0xd68] sm:$0xff]
    %v814 = vld [vmem:[#allocation2 + $0xd70] sm:$0xff]
    %v815 = vld [vmem:[#allocation2 + $0xd78] sm:$0xff]
    %v816 = vld [vmem:[#allocation2 + $0xd80] sm:$0xff]
    %v817 = vld [vmem:[#allocation2 + $0xd88] sm:$0xff]
    %v818 = vld [vmem:[#allocation2 + $0xd90] sm:$0xff]
    %v819 = vld [vmem:[#allocation2 + $0xd98] sm:$0xff]
    %v820 = vld [vmem:[#allocation2 + $0xda0] sm:$0xff]
    %v821 = vld [vmem:[#allocation2 + $0xda8] sm:$0xff]
    %v822 = vld [vmem:[#allocation2 + $0xdb0] sm:$0xff]
    %v823 = vld [vmem:[#allocation2 + $0xdb8] sm:$0xff]
    %v824 = vld [vmem:[#allocation2 + $0xdc0] sm:$0xff]
    %v825 = vld [vmem:[#allocation2 + $0xdc8] sm:$0xff]
    %v826 = vld [vmem:[#allocation2 + $0xdd0] sm:$0xff]
    %v827 = vld [vmem:[#allocation2 + $0xdd8] sm:$0xff]
    %v828 = vld [vmem:[#allocation2 + $0xde0] sm:$0xff]
    %v829 = vld [vmem:[#allocation2 + $0xde8] sm:$0xff]
    %v830 = vld [vmem:[#allocation2 + $0xdf0] sm:$0xff]
    %v831 = vld [vmem:[#allocation2 + $0xdf8] sm:$0xff]
    %v832 = vld [vmem:[#allocation2 + $0xe00] sm:$0xff]
    %v833 = vld [vmem:[#allocation2 + $0xe08] sm:$0xff]
    %v834 = vld [vmem:[#allocation2 + $0xe10] sm:$0xff]
    %v835 = vld [vmem:[#allocation2 + $0xe18] sm:$0xff]
    %v836 = vld [vmem:[#allocation2 + $0xe20] sm:$0xff]
    %v837 = vld [vmem:[#allocation2 + $0xe28] sm:$0xff]
    %v838 = vld [vmem:[#allocation2 + $0xe30] sm:$0xff]
    %v839 = vld [vmem:[#allocation2 + $0xe38] sm:$0xff]
    %v840 = vld [vmem:[#allocation2 + $0xe40] sm:$0xff]
    %v841 = vld [vmem:[#allocation2 + $0xe48] sm:$0xff]
    %v842 = vld [vmem:[#allocation2 + $0xe50] sm:$0xff]
    %v843 = vld [vmem:[#allocation2 + $0xe58] sm:$0xff]
    %v844 = vld [vmem:[#allocation2 + $0xe60] sm:$0xff]
    %v845 = vld [vmem:[#allocation2 + $0xe68] sm:$0xff]
    %v846 = vld [vmem:[#allocation2 + $0xe70] sm:$0xff]
    %v847 = vld [vmem:[#allocation2 + $0xe78] sm:$0xff]
    %v848 = vld [vmem:[#allocation2 + $0xe80] sm:$0xff]
    %v849 = vld [vmem:[#allocation2 + $0xe88] sm:$0xff]
    %v850 = vld [vmem:[#allocation2 + $0xe90] sm:$0xff]
    %v851 = vld [vmem:[#allocation2 + $0xe98] sm:$0xff]
    %v852 = vld [vmem:[#allocation2 + $0xea0] sm:$0xff]
    %v853 = vld [vmem:[#allocation2 + $0xea8] sm:$0xff]
    %v854 = vld [vmem:[#allocation2 + $0xeb0] sm:$0xff]
    %v855 = vld [vmem:[#allocation2 + $0xeb8] sm:$0xff]
    %v856 = vld [vmem:[#allocation2 + $0xec0] sm:$0xff]
    %v857 = vld [vmem:[#allocation2 + $0xec8] sm:$0xff]
    %v858 = vld [vmem:[#allocation2 + $0xed0] sm:$0xff]
    %v859 = vld [vmem:[#allocation2 + $0xed8] sm:$0xff]
    %v860 = vld [vmem:[#allocation2 + $0xee0] sm:$0xff]
    %v861 = vld [vmem:[#allocation2 + $0xee8] sm:$0xff]
    %v862 = vld [vmem:[#allocation2 + $0xef0] sm:$0xff]
    %v863 = vld [vmem:[#allocation2 + $0xef8] sm:$0xff]
    %v864 = vld [vmem:[#allocation2 + $0xf00] sm:$0xff]
    %v865 = vld [vmem:[#allocation2 + $0xf08] sm:$0xff]
    %v866 = vld [vmem:[#allocation2 + $0xf10] sm:$0xff]
    %v867 = vld [vmem:[#allocation2 + $0xf18] sm:$0xff]
    %v868 = vld [vmem:[#allocation2 + $0xf20] sm:$0xff]
    %v869 = vld [vmem:[#allocation2 + $0xf28] sm:$0xff]
    %v870 = vld [vmem:[#allocation2 + $0xf30] sm:$0xff]
    %v871 = vld [vmem:[#allocation2 + $0xf38] sm:$0xff]
    %v872 = vld [vmem:[#allocation2 + $0xf40] sm:$0xff]
    %v873 = vld [vmem:[#allocation2 + $0xf48] sm:$0xff]
    %v874 = vld [vmem:[#allocation2 + $0xf50] sm:$0xff]
    %v875 = vld [vmem:[#allocation2 + $0xf58] sm:$0xff]
    %v876 = vld [vmem:[#allocation2 + $0xf60] sm:$0xff]
    %v877 = vld [vmem:[#allocation2 + $0xf68] sm:$0xff]
    %v878 = vld [vmem:[#allocation2 + $0xf70] sm:$0xff]
    %v879 = vld [vmem:[#allocation2 + $0xf78] sm:$0xff]
    %v880 = vld [vmem:[#allocation2 + $0xf80] sm:$0xff]
    %v881 = vld [vmem:[#allocation2 + $0xf88] sm:$0xff]
    %v882 = vld [vmem:[#allocation2 + $0xf90] sm:$0xff]
    %v883 = vld [vmem:[#allocation2 + $0xf98] sm:$0xff]
    %v884 = vld [vmem:[#allocation2 + $0xfa0] sm:$0xff]
    %v885 = vld [vmem:[#allocation2 + $0xfa8] sm:$0xff]
    %v886 = vld [vmem:[#allocation2 + $0xfb0] sm:$0xff]
    %v887 = vld [vmem:[#allocation2 + $0xfb8] sm:$0xff]
    %v888 = vld [vmem:[#allocation2 + $0xfc0] sm:$0xff]
    %v889 = vld [vmem:[#allocation2 + $0xfc8] sm:$0xff]
    %v890 = vld [vmem:[#allocation2 + $0xfd0] sm:$0xff]
    %v891 = vld [vmem:[#allocation2 + $0xfd8] sm:$0xff]
    %v892 = vld [vmem:[#allocation2 + $0xfe0] sm:$0xff]
    %v893 = vld [vmem:[#allocation2 + $0xfe8] sm:$0xff]
    %v894 = vld [vmem:[#allocation2 + $0xff0] sm:$0xff]
    %v895 = vld [vmem:[#allocation2 + $0xff8] sm:$0xff]
    %896 = vmatprep.subr.bf16.mxu0 %v385
    %897 = vmatpush1.bf16.msra.mxu0 %v384
    %898 = vmatprep.subr.bf16.mxu0 %v393
    %899 = vmatpush1.bf16.msra.mxu0 %v392
    %900 = vmatprep.subr.bf16.mxu0 %v401
    %901 = vmatpush1.bf16.msra.mxu0 %v400
    %902 = vmatprep.subr.bf16.mxu0 %v409
    %903 = vmatpush1.bf16.msra.mxu0 %v408
    %904 = vmatprep.subr.bf16.mxu0 %v417
    %905 = vmatpush1.bf16.msra.mxu0 %v416
    %906 = vmatprep.subr.bf16.mxu0 %v425
    %907 = vmatpush1.bf16.msra.mxu0 %v424
    %908 = vmatprep.subr.bf16.mxu0 %v433
    %909 = vmatpush1.bf16.msra.mxu0 %v432
    %910 = vmatprep.subr.bf16.mxu0 %v441
    %911 = vmatpush1.bf16.msra.mxu0 %v440
    %912 = vmatprep.subr.bf16.mxu0 %v449
    %913 = vmatpush1.bf16.msra.mxu0 %v448
    %914 = vmatprep.subr.bf16.mxu0 %v457
    %915 = vmatpush1.bf16.msra.mxu0 %v456
    %916 = vmatprep.subr.bf16.mxu0 %v465
    %917 = vmatpush1.bf16.msra.mxu0 %v464
    %918 = vmatprep.subr.bf16.mxu0 %v473
    %919 = vmatpush1.bf16.msra.mxu0 %v472
    %920 = vmatprep.subr.bf16.mxu0 %v481
    %921 = vmatpush1.bf16.msra.mxu0 %v480
    %922 = vmatprep.subr.bf16.mxu0 %v489
    %923 = vmatpush1.bf16.msra.mxu0 %v488
    %924 = vmatprep.subr.bf16.mxu0 %v497
    %925 = vmatpush1.bf16.msra.mxu0 %v496
    %926 = vmatprep.subr.bf16.mxu0 %v505
    %927 = vmatpush1.bf16.msra.mxu0 %v504
    %928 = vmatprep.mubr.bf16.mxu0 %v270
    %929 = vmatmul.mubr.bf16.gmra.mrb[0].mxu0 %v269
    %v930 = vpop.f32.mrb[0].mxu0
    %v931 = vadd.f32 0.0, %v930
    %v932 = vpop.f32.mrb[0].mxu0
    %v933 = vadd.f32 0.0, %v932
    %v934 = vpop.f32.mrb[0].mxu0
    %v935 = vpop.f32.mrb[0].mxu0
    %936 = vdwg.mxu0
    %937 = vmatprep.subr.bf16.mxu0 %v513
    %938 = vmatpush1.bf16.msra.mxu0 %v512
    %939 = vmatprep.subr.bf16.mxu0 %v521
    %940 = vmatpush1.bf16.msra.mxu0 %v520
    %941 = vmatprep.subr.bf16.mxu0 %v529
    %942 = vmatpush1.bf16.msra.mxu0 %v528
    %943 = vmatprep.subr.bf16.mxu0 %v537
    %944 = vmatpush1.bf16.msra.mxu0 %v536
    %945 = vmatprep.subr.bf16.mxu0 %v545
    %946 = vmatpush1.bf16.msra.mxu0 %v544
    %947 = vmatprep.subr.bf16.mxu0 %v553
    %948 = vmatpush1.bf16.msra.mxu0 %v552
    %949 = vmatprep.subr.bf16.mxu0 %v561
    %950 = vmatpush1.bf16.msra.mxu0 %v560
    %951 = vmatprep.subr.bf16.mxu0 %v569
    %952 = vmatpush1.bf16.msra.mxu0 %v568
    %953 = vmatprep.subr.bf16.mxu0 %v577
    %954 = vmatpush1.bf16.msra.mxu0 %v576
    %955 = vmatprep.subr.bf16.mxu0 %v585
    %956 = vmatpush1.bf16.msra.mxu0 %v584
    %957 = vmatprep.subr.bf16.mxu0 %v593
    %958 = vmatpush1.bf16.msra.mxu0 %v592
    %959 = vmatprep.subr.bf16.mxu0 %v601
    %960 = vmatpush1.bf16.msra.mxu0 %v600
    %961 = vmatprep.subr.bf16.mxu0 %v609
    %962 = vmatpush1.bf16.msra.mxu0 %v608
    %963 = vmatprep.subr.bf16.mxu0 %v617
    %964 = vmatpush1.bf16.msra.mxu0 %v616
    %965 = vmatprep.subr.bf16.mxu0 %v625
    %966 = vmatpush1.bf16.msra.mxu0 %v624
    %967 = vmatprep.subr.bf16.mxu0 %v633
    %968 = vmatpush1.bf16.msra.mxu0 %v632
    %969 = vmatprep.mubr.bf16.mxu0 %v272
    %970 = vmatmul.mubr.bf16.gmra.mrb[0].mxu0 %v271
    %v971 = vpop.f32.mrb[0].mxu0
    %v972 = vadd.f32 %v931, %v971
    %v973 = vpop.f32.mrb[0].mxu0
    %v974 = vadd.f32 %v933, %v973
    %v975 = vpop.f32.mrb[0].mxu0
    %v976 = vpop.f32.mrb[0].mxu0
    %977 = vdwg.mxu0
    %978 = vmatprep.subr.bf16.mxu0 %v641
    %979 = vmatpush1.bf16.msra.mxu0 %v640
    %980 = vmatprep.subr.bf16.mxu0 %v649
    %981 = vmatpush1.bf16.msra.mxu0 %v648
    %982 = vmatprep.subr.bf16.mxu0 %v657
    %983 = vmatpush1.bf16.msra.mxu0 %v656
    %984 = vmatprep.subr.bf16.mxu0 %v665
    %985 = vmatpush1.bf16.msra.mxu0 %v664
    %986 = vmatprep.subr.bf16.mxu0 %v673
    %987 = vmatpush1.bf16.msra.mxu0 %v672
    %988 = vmatprep.subr.bf16.mxu0 %v681
    %989 = vmatpush1.bf16.msra.mxu0 %v680
    %990 = vmatprep.subr.bf16.mxu0 %v689
    %991 = vmatpush1.bf16.msra.mxu0 %v688
    %992 = vmatprep.subr.bf16.mxu0 %v697
    %993 = vmatpush1.bf16.msra.mxu0 %v696
    %994 = vmatprep.subr.bf16.mxu0 %v705
    %995 = vmatpush1.bf16.msra.mxu0 %v704
    %996 = vmatprep.subr.bf16.mxu0 %v713
    %997 = vmatpush1.bf16.msra.mxu0 %v712
    %998 = vmatprep.subr.bf16.mxu0 %v721
    %999 = vmatpush1.bf16.msra.mxu0 %v720
    %1000 = vmatprep.subr.bf16.mxu0 %v729
    %1001 = vmatpush1.bf16.msra.mxu0 %v728
    %1002 = vmatprep.subr.bf16.mxu0 %v737
    %1003 = vmatpush1.bf16.msra.mxu0 %v736
    %1004 = vmatprep.subr.bf16.mxu0 %v745
    %1005 = vmatpush1.bf16.msra.mxu0 %v744
    %1006 = vmatprep.subr.bf16.mxu0 %v753
    %1007 = vmatpush1.bf16.msra.mxu0 %v752
    %1008 = vmatprep.subr.bf16.mxu0 %v761
    %1009 = vmatpush1.bf16.msra.mxu0 %v760
    %1010 = vmatprep.mubr.bf16.mxu0 %v274
    %1011 = vmatmul.mubr.bf16.gmra.mrb[0].mxu0 %v273
    %v1012 = vpop.f32.mrb[0].mxu0
    %v1013 = vadd.f32 %v972, %v1012
    %v1014 = vpop.f32.mrb[0].mxu0
    %v1015 = vadd.f32 %v974, %v1014
    %v1016 = vpop.f32.mrb[0].mxu0
    %v1017 = vpop.f32.mrb[0].mxu0
    %1018 = vdwg.mxu0
    %1019 = vmatprep.subr.bf16.mxu0 %v769
    %1020 = vmatpush1.bf16.msra.mxu0 %v768
    %1021 = vmatprep.subr.bf16.mxu0 %v777
    %1022 = vmatpush1.bf16.msra.mxu0 %v776
    %1023 = vmatprep.subr.bf16.mxu0 %v785
    %1024 = vmatpush1.bf16.msra.mxu0 %v784
    %1025 = vmatprep.subr.bf16.mxu0 %v793
    %1026 = vmatpush1.bf16.msra.mxu0 %v792
    %1027 = vmatprep.subr.bf16.mxu0 %v801
    %1028 = vmatpush1.bf16.msra.mxu0 %v800
    %1029 = vmatprep.subr.bf16.mxu0 %v809
    %1030 = vmatpush1.bf16.msra.mxu0 %v808
    %1031 = vmatprep.subr.bf16.mxu0 %v817
    %1032 = vmatpush1.bf16.msra.mxu0 %v816
    %1033 = vmatprep.subr.bf16.mxu0 %v825
    %1034 = vmatpush1.bf16.msra.mxu0 %v824
    %1035 = vmatprep.subr.bf16.mxu0 %v833
    %1036 = vmatpush1.bf16.msra.mxu0 %v832
    %1037 = vmatprep.subr.bf16.mxu0 %v841
    %1038 = vmatpush1.bf16.msra.mxu0 %v840
    %1039 = vmatprep.subr.bf16.mxu0 %v849
    %1040 = vmatpush1.bf16.msra.mxu0 %v848
    %1041 = vmatprep.subr.bf16.mxu0 %v857
    %1042 = vmatpush1.bf16.msra.mxu0 %v856
    %1043 = vmatprep.subr.bf16.mxu0 %v865
    %1044 = vmatpush1.bf16.msra.mxu0 %v864
    %1045 = vmatprep.subr.bf16.mxu0 %v873
    %1046 = vmatpush1.bf16.msra.mxu0 %v872
    %1047 = vmatprep.subr.bf16.mxu0 %v881
    %1048 = vmatpush1.bf16.msra.mxu0 %v880
    %1049 = vmatprep.subr.bf16.mxu0 %v889
    %1050 = vmatpush1.bf16.msra.mxu0 %v888
    %1051 = vmatprep.mubr.bf16.mxu0 %v276
    %1052 = vmatmul.mubr.bf16.gmra.mrb[0].mxu0 %v275
    %v1053 = vpop.f32.mrb[0].mxu0
    %v1054 = vadd.f32 %v1013, %v1053
    %v1055 = vpop.f32.mrb[0].mxu0
    %v1056 = vadd.f32 %v1015, %v1055
    %v1057 = vpop.f32.mrb[0].mxu0
    %v1058 = vpop.f32.mrb[0].mxu0
    %1059 = vdwg.mxu0
    %1060 = vmatprep.subr.bf16.mxu0 %v387
    %1061 = vmatpush1.bf16.msra.mxu0 %v386
    %1062 = vmatprep.subr.bf16.mxu0 %v395
    %1063 = vmatpush1.bf16.msra.mxu0 %v394
    %1064 = vmatprep.subr.bf16.mxu0 %v403
    %1065 = vmatpush1.bf16.msra.mxu0 %v402
    %1066 = vmatprep.subr.bf16.mxu0 %v411
    %1067 = vmatpush1.bf16.msra.mxu0 %v410
    %1068 = vmatprep.subr.bf16.mxu0 %v419
    %1069 = vmatpush1.bf16.msra.mxu0 %v418
    %1070 = vmatprep.subr.bf16.mxu0 %v427
    %1071 = vmatpush1.bf16.msra.mxu0 %v426
    %1072 = vmatprep.subr.bf16.mxu0 %v435
    %1073 = vmatpush1.bf16.msra.mxu0 %v434
    %1074 = vmatprep.subr.bf16.mxu0 %v443
    %1075 = vmatpush1.bf16.msra.mxu0 %v442
    %1076 = vmatprep.subr.bf16.mxu0 %v451
    %1077 = vmatpush1.bf16.msra.mxu0 %v450
    %1078 = vmatprep.subr.bf16.mxu0 %v459
    %1079 = vmatpush1.bf16.msra.mxu0 %v458
    %1080 = vmatprep.subr.bf16.mxu0 %v467
    %1081 = vmatpush1.bf16.msra.mxu0 %v466
    %1082 = vmatprep.subr.bf16.mxu0 %v475
    %1083 = vmatpush1.bf16.msra.mxu0 %v474
    %1084 = vmatprep.subr.bf16.mxu0 %v483
    %1085 = vmatpush1.bf16.msra.mxu0 %v482
    %1086 = vmatprep.subr.bf16.mxu0 %v491
    %1087 = vmatpush1.bf16.msra.mxu0 %v490
    %1088 = vmatprep.subr.bf16.mxu0 %v499
    %1089 = vmatpush1.bf16.msra.mxu0 %v498
    %1090 = vmatprep.subr.bf16.mxu0 %v507
    %1091 = vmatpush1.bf16.msra.mxu0 %v506
    %1092 = vmatprep.mubr.bf16.mxu0 %v270
    %1093 = vmatmul.mubr.bf16.gmra.mrb[0].mxu0 %v269
    %v1094 = vpop.f32.mrb[0].mxu0
    %v1095 = vadd.f32 0.0, %v1094
    %v1096 = vpop.f32.mrb[0].mxu0
    %v1097 = vadd.f32 0.0, %v1096
    %v1098 = vpop.f32.mrb[0].mxu0
    %v1099 = vpop.f32.mrb[0].mxu0
    %1100 = vdwg.mxu0
    %1101 = vmatprep.subr.bf16.mxu0 %v515
    %1102 = vmatpush1.bf16.msra.mxu0 %v514
    %1103 = vmatprep.subr.bf16.mxu0 %v523
    %1104 = vmatpush1.bf16.msra.mxu0 %v522
    %1105 = vmatprep.subr.bf16.mxu0 %v531
    %1106 = vmatpush1.bf16.msra.mxu0 %v530
    %1107 = vmatprep.subr.bf16.mxu0 %v539
    %1108 = vmatpush1.bf16.msra.mxu0 %v538
    %1109 = vmatprep.subr.bf16.mxu0 %v547
    %1110 = vmatpush1.bf16.msra.mxu0 %v546
    %1111 = vmatprep.subr.bf16.mxu0 %v555
    %1112 = vmatpush1.bf16.msra.mxu0 %v554
    %1113 = vmatprep.subr.bf16.mxu0 %v563
    %1114 = vmatpush1.bf16.msra.mxu0 %v562
    %1115 = vmatprep.subr.bf16.mxu0 %v571
    %1116 = vmatpush1.bf16.msra.mxu0 %v570
    %1117 = vmatprep.subr.bf16.mxu0 %v579
    %1118 = vmatpush1.bf16.msra.mxu0 %v578
    %1119 = vmatprep.subr.bf16.mxu0 %v587
    %1120 = vmatpush1.bf16.msra.mxu0 %v586
    %1121 = vmatprep.subr.bf16.mxu0 %v595
    %1122 = vmatpush1.bf16.msra.mxu0 %v594
    %1123 = vmatprep.subr.bf16.mxu0 %v603
    %1124 = vmatpush1.bf16.msra.mxu0 %v602
    %1125 = vmatprep.subr.bf16.mxu0 %v611
    %1126 = vmatpush1.bf16.msra.mxu0 %v610
    %1127 = vmatprep.subr.bf16.mxu0 %v619
    %1128 = vmatpush1.bf16.msra.mxu0 %v618
    %1129 = vmatprep.subr.bf16.mxu0 %v627
    %1130 = vmatpush1.bf16.msra.mxu0 %v626
    %1131 = vmatprep.subr.bf16.mxu0 %v635
    %1132 = vmatpush1.bf16.msra.mxu0 %v634
    %1133 = vmatprep.mubr.bf16.mxu0 %v272
    %1134 = vmatmul.mubr.bf16.gmra.mrb[0].mxu0 %v271
    %v1135 = vpop.f32.mrb[0].mxu0
    %v1136 = vadd.f32 %v1095, %v1135
    %v1137 = vpop.f32.mrb[0].mxu0
    %v1138 = vadd.f32 %v1097, %v1137
    %v1139 = vpop.f32.mrb[0].mxu0
    %v1140 = vpop.f32.mrb[0].mxu0
    %1141 = vdwg.mxu0
    %1142 = vmatprep.subr.bf16.mxu0 %v643
    %1143 = vmatpush1.bf16.msra.mxu0 %v642
    %1144 = vmatprep.subr.bf16.mxu0 %v651
    %1145 = vmatpush1.bf16.msra.mxu0 %v650
    %1146 = vmatprep.subr.bf16.mxu0 %v659
    %1147 = vmatpush1.bf16.msra.mxu0 %v658
    %1148 = vmatprep.subr.bf16.mxu0 %v667
    %1149 = vmatpush1.bf16.msra.mxu0 %v666
    %1150 = vmatprep.subr.bf16.mxu0 %v675
    %1151 = vmatpush1.bf16.msra.mxu0 %v674
    %1152 = vmatprep.subr.bf16.mxu0 %v683
    %1153 = vmatpush1.bf16.msra.mxu0 %v682
    %1154 = vmatprep.subr.bf16.mxu0 %v691
    %1155 = vmatpush1.bf16.msra.mxu0 %v690
    %1156 = vmatprep.subr.bf16.mxu0 %v699
    %1157 = vmatpush1.bf16.msra.mxu0 %v698
    %1158 = vmatprep.subr.bf16.mxu0 %v707
    %1159 = vmatpush1.bf16.msra.mxu0 %v706
    %1160 = vmatprep.subr.bf16.mxu0 %v715
    %1161 = vmatpush1.bf16.msra.mxu0 %v714
    %1162 = vmatprep.subr.bf16.mxu0 %v723
    %1163 = vmatpush1.bf16.msra.mxu0 %v722
    %1164 = vmatprep.subr.bf16.mxu0 %v731
    %1165 = vmatpush1.bf16.msra.mxu0 %v730
    %1166 = vmatprep.subr.bf16.mxu0 %v739
    %1167 = vmatpush1.bf16.msra.mxu0 %v738
    %1168 = vmatprep.subr.bf16.mxu0 %v747
    %1169 = vmatpush1.bf16.msra.mxu0 %v746
    %1170 = vmatprep.subr.bf16.mxu0 %v755
    %1171 = vmatpush1.bf16.msra.mxu0 %v754
    %1172 = vmatprep.subr.bf16.mxu0 %v763
    %1173 = vmatpush1.bf16.msra.mxu0 %v762
    %1174 = vmatprep.mubr.bf16.mxu0 %v274
    %1175 = vmatmul.mubr.bf16.gmra.mrb[0].mxu0 %v273
    %v1176 = vpop.f32.mrb[0].mxu0
    %v1177 = vadd.f32 %v1136, %v1176
    %v1178 = vpop.f32.mrb[0].mxu0
    %v1179 = vadd.f32 %v1138, %v1178
    %v1180 = vpop.f32.mrb[0].mxu0
    %v1181 = vpop.f32.mrb[0].mxu0
    %1182 = vdwg.mxu0
    %1183 = vmatprep.subr.bf16.mxu0 %v771
    %1184 = vmatpush1.bf16.msra.mxu0 %v770
    %1185 = vmatprep.subr.bf16.mxu0 %v779
    %1186 = vmatpush1.bf16.msra.mxu0 %v778
    %1187 = vmatprep.subr.bf16.mxu0 %v787
    %1188 = vmatpush1.bf16.msra.mxu0 %v786
    %1189 = vmatprep.subr.bf16.mxu0 %v795
    %1190 = vmatpush1.bf16.msra.mxu0 %v794
    %1191 = vmatprep.subr.bf16.mxu0 %v803
    %1192 = vmatpush1.bf16.msra.mxu0 %v802
    %1193 = vmatprep.subr.bf16.mxu0 %v811
    %1194 = vmatpush1.bf16.msra.mxu0 %v810
    %1195 = vmatprep.subr.bf16.mxu0 %v819
    %1196 = vmatpush1.bf16.msra.mxu0 %v818
    %1197 = vmatprep.subr.bf16.mxu0 %v827
    %1198 = vmatpush1.bf16.msra.mxu0 %v826
    %1199 = vmatprep.subr.bf16.mxu0 %v835
    %1200 = vmatpush1.bf16.msra.mxu0 %v834
    %1201 = vmatprep.subr.bf16.mxu0 %v843
    %1202 = vmatpush1.bf16.msra.mxu0 %v842
    %1203 = vmatprep.subr.bf16.mxu0 %v851
    %1204 = vmatpush1.bf16.msra.mxu0 %v850
    %1205 = vmatprep.subr.bf16.mxu0 %v859
    %1206 = vmatpush1.bf16.msra.mxu0 %v858
    %1207 = vmatprep.subr.bf16.mxu0 %v867
    %1208 = vmatpush1.bf16.msra.mxu0 %v866
    %1209 = vmatprep.subr.bf16.mxu0 %v875
    %1210 = vmatpush1.bf16.msra.mxu0 %v874
    %1211 = vmatprep.subr.bf16.mxu0 %v883
    %1212 = vmatpush1.bf16.msra.mxu0 %v882
    %1213 = vmatprep.subr.bf16.mxu0 %v891
    %1214 = vmatpush1.bf16.msra.mxu0 %v890
    %1215 = vmatprep.mubr.bf16.mxu0 %v276
    %1216 = vmatmul.mubr.bf16.gmra.mrb[0].mxu0 %v275
    %v1217 = vpop.f32.mrb[0].mxu0
    %v1218 = vadd.f32 %v1177, %v1217
    %v1219 = vpop.f32.mrb[0].mxu0
    %v1220 = vadd.f32 %v1179, %v1219
    %v1221 = vpop.f32.mrb[0].mxu0
    %v1222 = vpop.f32.mrb[0].mxu0
    %1223 = vdwg.mxu0
    %1224 = vmatprep.subr.bf16.mxu0 %v389
    %1225 = vmatpush1.bf16.msra.mxu0 %v388
    %1226 = vmatprep.subr.bf16.mxu0 %v397
    %1227 = vmatpush1.bf16.msra.mxu0 %v396
    %1228 = vmatprep.subr.bf16.mxu0 %v405
    %1229 = vmatpush1.bf16.msra.mxu0 %v404
    %1230 = vmatprep.subr.bf16.mxu0 %v413
    %1231 = vmatpush1.bf16.msra.mxu0 %v412
    %1232 = vmatprep.subr.bf16.mxu0 %v421
    %1233 = vmatpush1.bf16.msra.mxu0 %v420
    %1234 = vmatprep.subr.bf16.mxu0 %v429
    %1235 = vmatpush1.bf16.msra.mxu0 %v428
    %1236 = vmatprep.subr.bf16.mxu0 %v437
    %1237 = vmatpush1.bf16.msra.mxu0 %v436
    %1238 = vmatprep.subr.bf16.mxu0 %v445
    %1239 = vmatpush1.bf16.msra.mxu0 %v444
    %1240 = vmatprep.subr.bf16.mxu0 %v453
    %1241 = vmatpush1.bf16.msra.mxu0 %v452
    %1242 = vmatprep.subr.bf16.mxu0 %v461
    %1243 = vmatpush1.bf16.msra.mxu0 %v460
    %1244 = vmatprep.subr.bf16.mxu0 %v469
    %1245 = vmatpush1.bf16.msra.mxu0 %v468
    %1246 = vmatprep.subr.bf16.mxu0 %v477
    %1247 = vmatpush1.bf16.msra.mxu0 %v476
    %1248 = vmatprep.subr.bf16.mxu0 %v485
    %1249 = vmatpush1.bf16.msra.mxu0 %v484
    %1250 = vmatprep.subr.bf16.mxu0 %v493
    %1251 = vmatpush1.bf16.msra.mxu0 %v492
    %1252 = vmatprep.subr.bf16.mxu0 %v501
    %1253 = vmatpush1.bf16.msra.mxu0 %v500
    %1254 = vmatprep.subr.bf16.mxu0 %v509
    %1255 = vmatpush1.bf16.msra.mxu0 %v508
    %1256 = vmatprep.mubr.bf16.mxu0 %v270
    %1257 = vmatmul.mubr.bf16.gmra.mrb[0].mxu0 %v269
    %v1258 = vpop.f32.mrb[0].mxu0
    %v1259 = vadd.f32 0.0, %v1258
    %v1260 = vpop.f32.mrb[0].mxu0
    %v1261 = vadd.f32 0.0, %v1260
    %v1262 = vpop.f32.mrb[0].mxu0
    %v1263 = vpop.f32.mrb[0].mxu0
    %1264 = vdwg.mxu0
    %1265 = vmatprep.subr.bf16.mxu0 %v517
    %1266 = vmatpush1.bf16.msra.mxu0 %v516
    %1267 = vmatprep.subr.bf16.mxu0 %v525
    %1268 = vmatpush1.bf16.msra.mxu0 %v524
    %1269 = vmatprep.subr.bf16.mxu0 %v533
    %1270 = vmatpush1.bf16.msra.mxu0 %v532
    %1271 = vmatprep.subr.bf16.mxu0 %v541
    %1272 = vmatpush1.bf16.msra.mxu0 %v540
    %1273 = vmatprep.subr.bf16.mxu0 %v549
    %1274 = vmatpush1.bf16.msra.mxu0 %v548
    %1275 = vmatprep.subr.bf16.mxu0 %v557
    %1276 = vmatpush1.bf16.msra.mxu0 %v556
    %1277 = vmatprep.subr.bf16.mxu0 %v565
    %1278 = vmatpush1.bf16.msra.mxu0 %v564
    %1279 = vmatprep.subr.bf16.mxu0 %v573
    %1280 = vmatpush1.bf16.msra.mxu0 %v572
    %1281 = vmatprep.subr.bf16.mxu0 %v581
    %1282 = vmatpush1.bf16.msra.mxu0 %v580
    %1283 = vmatprep.subr.bf16.mxu0 %v589
    %1284 = vmatpush1.bf16.msra.mxu0 %v588
    %1285 = vmatprep.subr.bf16.mxu0 %v597
    %1286 = vmatpush1.bf16.msra.mxu0 %v596
    %1287 = vmatprep.subr.bf16.mxu0 %v605
    %1288 = vmatpush1.bf16.msra.mxu0 %v604
    %1289 = vmatprep.subr.bf16.mxu0 %v613
    %1290 = vmatpush1.bf16.msra.mxu0 %v612
    %1291 = vmatprep.subr.bf16.mxu0 %v621
    %1292 = vmatpush1.bf16.msra.mxu0 %v620
    %1293 = vmatprep.subr.bf16.mxu0 %v629
    %1294 = vmatpush1.bf16.msra.mxu0 %v628
    %1295 = vmatprep.subr.bf16.mxu0 %v637
    %1296 = vmatpush1.bf16.msra.mxu0 %v636
    %1297 = vmatprep.mubr.bf16.mxu0 %v272
    %1298 = vmatmul.mubr.bf16.gmra.mrb[0].mxu0 %v271
    %v1299 = vpop.f32.mrb[0].mxu0
    %v1300 = vadd.f32 %v1259, %v1299
    %v1301 = vpop.f32.mrb[0].mxu0
    %v1302 = vadd.f32 %v1261, %v1301
    %v1303 = vpop.f32.mrb[0].mxu0
    %v1304 = vpop.f32.mrb[0].mxu0
    %1305 = vdwg.mxu0
    %1306 = vmatprep.subr.bf16.mxu0 %v645
    %1307 = vmatpush1.bf16.msra.mxu0 %v644
    %1308 = vmatprep.subr.bf16.mxu0 %v653
    %1309 = vmatpush1.bf16.msra.mxu0 %v652
    %1310 = vmatprep.subr.bf16.mxu0 %v661
    %1311 = vmatpush1.bf16.msra.mxu0 %v660
    %1312 = vmatprep.subr.bf16.mxu0 %v669
    %1313 = vmatpush1.bf16.msra.mxu0 %v668
    %1314 = vmatprep.subr.bf16.mxu0 %v677
    %1315 = vmatpush1.bf16.msra.mxu0 %v676
    %1316 = vmatprep.subr.bf16.mxu0 %v685
    %1317 = vmatpush1.bf16.msra.mxu0 %v684
    %1318 = vmatprep.subr.bf16.mxu0 %v693
    %1319 = vmatpush1.bf16.msra.mxu0 %v692
    %1320 = vmatprep.subr.bf16.mxu0 %v701
    %1321 = vmatpush1.bf16.msra.mxu0 %v700
    %1322 = vmatprep.subr.bf16.mxu0 %v709
    %1323 = vmatpush1.bf16.msra.mxu0 %v708
    %1324 = vmatprep.subr.bf16.mxu0 %v717
    %1325 = vmatpush1.bf16.msra.mxu0 %v716
    %1326 = vmatprep.subr.bf16.mxu0 %v725
    %1327 = vmatpush1.bf16.msra.mxu0 %v724
    %1328 = vmatprep.subr.bf16.mxu0 %v733
    %1329 = vmatpush1.bf16.msra.mxu0 %v732
    %1330 = vmatprep.subr.bf16.mxu0 %v741
    %1331 = vmatpush1.bf16.msra.mxu0 %v740
    %1332 = vmatprep.subr.bf16.mxu0 %v749
    %1333 = vmatpush1.bf16.msra.mxu0 %v748
    %1334 = vmatprep.subr.bf16.mxu0 %v757
    %1335 = vmatpush1.bf16.msra.mxu0 %v756
    %1336 = vmatprep.subr.bf16.mxu0 %v765
    %1337 = vmatpush1.bf16.msra.mxu0 %v764
    %1338 = vmatprep.mubr.bf16.mxu0 %v274
    %1339 = vmatmul.mubr.bf16.gmra.mrb[0].mxu0 %v273
    %v1340 = vpop.f32.mrb[0].mxu0
    %v1341 = vadd.f32 %v1300, %v1340
    %v1342 = vpop.f32.mrb[0].mxu0
    %v1343 = vadd.f32 %v1302, %v1342
    %v1344 = vpop.f32.mrb[0].mxu0
    %v1345 = vpop.f32.mrb[0].mxu0
    %1346 = vdwg.mxu0
    %1347 = vmatprep.subr.bf16.mxu0 %v773
    %1348 = vmatpush1.bf16.msra.mxu0 %v772
    %1349 = vmatprep.subr.bf16.mxu0 %v781
    %1350 = vmatpush1.bf16.msra.mxu0 %v780
    %1351 = vmatprep.subr.bf16.mxu0 %v789
    %1352 = vmatpush1.bf16.msra.mxu0 %v788
    %1353 = vmatprep.subr.bf16.mxu0 %v797
    %1354 = vmatpush1.bf16.msra.mxu0 %v796
    %1355 = vmatprep.subr.bf16.mxu0 %v805
    %1356 = vmatpush1.bf16.msra.mxu0 %v804
    %1357 = vmatprep.subr.bf16.mxu0 %v813
    %1358 = vmatpush1.bf16.msra.mxu0 %v812
    %1359 = vmatprep.subr.bf16.mxu0 %v821
    %1360 = vmatpush1.bf16.msra.mxu0 %v820
    %1361 = vmatprep.subr.bf16.mxu0 %v829
    %1362 = vmatpush1.bf16.msra.mxu0 %v828
    %1363 = vmatprep.subr.bf16.mxu0 %v837
    %1364 = vmatpush1.bf16.msra.mxu0 %v836
    %1365 = vmatprep.subr.bf16.mxu0 %v845
    %1366 = vmatpush1.bf16.msra.mxu0 %v844
    %1367 = vmatprep.subr.bf16.mxu0 %v853
    %1368 = vmatpush1.bf16.msra.mxu0 %v852
    %1369 = vmatprep.subr.bf16.mxu0 %v861
    %1370 = vmatpush1.bf16.msra.mxu0 %v860
    %1371 = vmatprep.subr.bf16.mxu0 %v869
    %1372 = vmatpush1.bf16.msra.mxu0 %v868
    %1373 = vmatprep.subr.bf16.mxu0 %v877
    %1374 = vmatpush1.bf16.msra.mxu0 %v876
    %1375 = vmatprep.subr.bf16.mxu0 %v885
    %1376 = vmatpush1.bf16.msra.mxu0 %v884
    %1377 = vmatprep.subr.bf16.mxu0 %v893
    %1378 = vmatpush1.bf16.msra.mxu0 %v892
    %1379 = vmatprep.mubr.bf16.mxu0 %v276
    %1380 = vmatmul.mubr.bf16.gmra.mrb[0].mxu0 %v275
    %v1381 = vpop.f32.mrb[0].mxu0
    %v1382 = vadd.f32 %v1341, %v1381
    %v1383 = vpop.f32.mrb[0].mxu0
    %v1384 = vadd.f32 %v1343, %v1383
    %v1385 = vpop.f32.mrb[0].mxu0
    %v1386 = vpop.f32.mrb[0].mxu0
    %1387 = vdwg.mxu0
    %1388 = vmatprep.subr.bf16.mxu0 %v391
    %1389 = vmatpush1.bf16.msra.mxu0 %v390
    %1390 = vmatprep.subr.bf16.mxu0 %v399
    %1391 = vmatpush1.bf16.msra.mxu0 %v398
    %1392 = vmatprep.subr.bf16.mxu0 %v407
    %1393 = vmatpush1.bf16.msra.mxu0 %v406
    %1394 = vmatprep.subr.bf16.mxu0 %v415
    %1395 = vmatpush1.bf16.msra.mxu0 %v414
    %1396 = vmatprep.subr.bf16.mxu0 %v423
    %1397 = vmatpush1.bf16.msra.mxu0 %v422
    %1398 = vmatprep.subr.bf16.mxu0 %v431
    %1399 = vmatpush1.bf16.msra.mxu0 %v430
    %1400 = vmatprep.subr.bf16.mxu0 %v439
    %1401 = vmatpush1.bf16.msra.mxu0 %v438
    %1402 = vmatprep.subr.bf16.mxu0 %v447
    %1403 = vmatpush1.bf16.msra.mxu0 %v446
    %1404 = vmatprep.subr.bf16.mxu0 %v455
    %1405 = vmatpush1.bf16.msra.mxu0 %v454
    %1406 = vmatprep.subr.bf16.mxu0 %v463
    %1407 = vmatpush1.bf16.msra.mxu0 %v462
    %1408 = vmatprep.subr.bf16.mxu0 %v471
    %1409 = vmatpush1.bf16.msra.mxu0 %v470
    %1410 = vmatprep.subr.bf16.mxu0 %v479
    %1411 = vmatpush1.bf16.msra.mxu0 %v478
    %1412 = vmatprep.subr.bf16.mxu0 %v487
    %1413 = vmatpush1.bf16.msra.mxu0 %v486
    %1414 = vmatprep.subr.bf16.mxu0 %v495
    %1415 = vmatpush1.bf16.msra.mxu0 %v494
    %1416 = vmatprep.subr.bf16.mxu0 %v503
    %1417 = vmatpush1.bf16.msra.mxu0 %v502
    %1418 = vmatprep.subr.bf16.mxu0 %v511
    %1419 = vmatpush1.bf16.msra.mxu0 %v510
    %1420 = vmatprep.mubr.bf16.mxu0 %v270
    %1421 = vmatmul.mubr.bf16.gmra.mrb[0].mxu0 %v269
    %v1422 = vpop.f32.mrb[0].mxu0
    %v1423 = vadd.f32 0.0, %v1422
    %v1424 = vpop.f32.mrb[0].mxu0
    %v1425 = vadd.f32 0.0, %v1424
    %v1426 = vpop.f32.mrb[0].mxu0
    %v1427 = vpop.f32.mrb[0].mxu0
    %1428 = vdwg.mxu0
    %1429 = vmatprep.subr.bf16.mxu0 %v519
    %1430 = vmatpush1.bf16.msra.mxu0 %v518
    %1431 = vmatprep.subr.bf16.mxu0 %v527
    %1432 = vmatpush1.bf16.msra.mxu0 %v526
    %1433 = vmatprep.subr.bf16.mxu0 %v535
    %1434 = vmatpush1.bf16.msra.mxu0 %v534
    %1435 = vmatprep.subr.bf16.mxu0 %v543
    %1436 = vmatpush1.bf16.msra.mxu0 %v542
    %1437 = vmatprep.subr.bf16.mxu0 %v551
    %1438 = vmatpush1.bf16.msra.mxu0 %v550
    %1439 = vmatprep.subr.bf16.mxu0 %v559
    %1440 = vmatpush1.bf16.msra.mxu0 %v558
    %1441 = vmatprep.subr.bf16.mxu0 %v567
    %1442 = vmatpush1.bf16.msra.mxu0 %v566
    %1443 = vmatprep.subr.bf16.mxu0 %v575
    %1444 = vmatpush1.bf16.msra.mxu0 %v574
    %1445 = vmatprep.subr.bf16.mxu0 %v583
    %1446 = vmatpush1.bf16.msra.mxu0 %v582
    %1447 = vmatprep.subr.bf16.mxu0 %v591
    %1448 = vmatpush1.bf16.msra.mxu0 %v590
    %1449 = vmatprep.subr.bf16.mxu0 %v599
    %1450 = vmatpush1.bf16.msra.mxu0 %v598
    %1451 = vmatprep.subr.bf16.mxu0 %v607
    %1452 = vmatpush1.bf16.msra.mxu0 %v606
    %1453 = vmatprep.subr.bf16.mxu0 %v615
    %1454 = vmatpush1.bf16.msra.mxu0 %v614
    %1455 = vmatprep.subr.bf16.mxu0 %v623
    %1456 = vmatpush1.bf16.msra.mxu0 %v622
    %1457 = vmatprep.subr.bf16.mxu0 %v631
    %1458 = vmatpush1.bf16.msra.mxu0 %v630
    %1459 = vmatprep.subr.bf16.mxu0 %v639
    %1460 = vmatpush1.bf16.msra.mxu0 %v638
    %1461 = vmatprep.mubr.bf16.mxu0 %v272
    %1462 = vmatmul.mubr.bf16.gmra.mrb[0].mxu0 %v271
    %v1463 = vpop.f32.mrb[0].mxu0
    %v1464 = vadd.f32 %v1423, %v1463
    %v1465 = vpop.f32.mrb[0].mxu0
    %v1466 = vadd.f32 %v1425, %v1465
    %v1467 = vpop.f32.mrb[0].mxu0
    %v1468 = vpop.f32.mrb[0].mxu0
    %1469 = vdwg.mxu0
    %1470 = vmatprep.subr.bf16.mxu0 %v647
    %1471 = vmatpush1.bf16.msra.mxu0 %v646
    %1472 = vmatprep.subr.bf16.mxu0 %v655
    %1473 = vmatpush1.bf16.msra.mxu0 %v654
    %1474 = vmatprep.subr.bf16.mxu0 %v663
    %1475 = vmatpush1.bf16.msra.mxu0 %v662
    %1476 = vmatprep.subr.bf16.mxu0 %v671
    %1477 = vmatpush1.bf16.msra.mxu0 %v670
    %1478 = vmatprep.subr.bf16.mxu0 %v679
    %1479 = vmatpush1.bf16.msra.mxu0 %v678
    %1480 = vmatprep.subr.bf16.mxu0 %v687
    %1481 = vmatpush1.bf16.msra.mxu0 %v686
    %1482 = vmatprep.subr.bf16.mxu0 %v695
    %1483 = vmatpush1.bf16.msra.mxu0 %v694
    %1484 = vmatprep.subr.bf16.mxu0 %v703
    %1485 = vmatpush1.bf16.msra.mxu0 %v702
    %1486 = vmatprep.subr.bf16.mxu0 %v711
    %1487 = vmatpush1.bf16.msra.mxu0 %v710
    %1488 = vmatprep.subr.bf16.mxu0 %v719
    %1489 = vmatpush1.bf16.msra.mxu0 %v718
    %1490 = vmatprep.subr.bf16.mxu0 %v727
    %1491 = vmatpush1.bf16.msra.mxu0 %v726
    %1492 = vmatprep.subr.bf16.mxu0 %v735
    %1493 = vmatpush1.bf16.msra.mxu0 %v734
    %1494 = vmatprep.subr.bf16.mxu0 %v743
    %1495 = vmatpush1.bf16.msra.mxu0 %v742
    %1496 = vmatprep.subr.bf16.mxu0 %v751
    %1497 = vmatpush1.bf16.msra.mxu0 %v750
    %1498 = vmatprep.subr.bf16.mxu0 %v759
    %1499 = vmatpush1.bf16.msra.mxu0 %v758
    %1500 = vmatprep.subr.bf16.mxu0 %v767
    %1501 = vmatpush1.bf16.msra.mxu0 %v766
    %1502 = vmatprep.mubr.bf16.mxu0 %v274
    %1503 = vmatmul.mubr.bf16.gmra.mrb[0].mxu0 %v273
    %v1504 = vpop.f32.mrb[0].mxu0
    %v1505 = vadd.f32 %v1464, %v1504
    %v1506 = vpop.f32.mrb[0].mxu0
    %v1507 = vadd.f32 %v1466, %v1506
    %v1508 = vpop.f32.mrb[0].mxu0
    %v1509 = vpop.f32.mrb[0].mxu0
    %1510 = vdwg.mxu0
    %1511 = vmatprep.subr.bf16.mxu0 %v775
    %1512 = vmatpush1.bf16.msra.mxu0 %v774
    %1513 = vmatprep.subr.bf16.mxu0 %v783
    %1514 = vmatpush1.bf16.msra.mxu0 %v782
    %1515 = vmatprep.subr.bf16.mxu0 %v791
    %1516 = vmatpush1.bf16.msra.mxu0 %v790
    %1517 = vmatprep.subr.bf16.mxu0 %v799
    %1518 = vmatpush1.bf16.msra.mxu0 %v798
    %1519 = vmatprep.subr.bf16.mxu0 %v807
    %1520 = vmatpush1.bf16.msra.mxu0 %v806
    %1521 = vmatprep.subr.bf16.mxu0 %v815
    %1522 = vmatpush1.bf16.msra.mxu0 %v814
    %1523 = vmatprep.subr.bf16.mxu0 %v823
    %1524 = vmatpush1.bf16.msra.mxu0 %v822
    %1525 = vmatprep.subr.bf16.mxu0 %v831
    %1526 = vmatpush1.bf16.msra.mxu0 %v830
    %1527 = vmatprep.subr.bf16.mxu0 %v839
    %1528 = vmatpush1.bf16.msra.mxu0 %v838
    %1529 = vmatprep.subr.bf16.mxu0 %v847
    %1530 = vmatpush1.bf16.msra.mxu0 %v846
    %1531 = vmatprep.subr.bf16.mxu0 %v855
    %1532 = vmatpush1.bf16.msra.mxu0 %v854
    %1533 = vmatprep.subr.bf16.mxu0 %v863
    %1534 = vmatpush1.bf16.msra.mxu0 %v862
    %1535 = vmatprep.subr.bf16.mxu0 %v871
    %1536 = vmatpush1.bf16.msra.mxu0 %v870
    %1537 = vmatprep.subr.bf16.mxu0 %v879
    %1538 = vmatpush1.bf16.msra.mxu0 %v878
    %1539 = vmatprep.subr.bf16.mxu0 %v887
    %1540 = vmatpush1.bf16.msra.mxu0 %v886
    %1541 = vmatprep.subr.bf16.mxu0 %v895
    %1542 = vmatpush1.bf16.msra.mxu0 %v894
    %1543 = vmatprep.mubr.bf16.mxu0 %v276
    %1544 = vmatmul.mubr.bf16.gmra.mrb[0].mxu0 %v275
    %v1545 = vpop.f32.mrb[0].mxu0
    %v1546 = vadd.f32 %v1505, %v1545
    %v1547 = vpop.f32.mrb[0].mxu0
    %v1548 = vadd.f32 %v1507, %v1547
    %v1549 = vpop.f32.mrb[0].mxu0
    %v1550 = vpop.f32.mrb[0].mxu0
    %1551 = vdwg.mxu0
    %s1552 = sshra.s32 %s100, 7
    %s1553 = sand.u32 %s100, 127
    %s1554 = smul.addr %s1552, 2
    %s1555 = scalar_lea.vmem [#allocation7], %s1554
    %v1556 = vld [vmem:[%s1555] sm:$0xff]
    %v1557 = vld [vmem:[%s1555 + $0x8] sm:$0xff]
    %v1560 = vcombine.high %v1556, %v1556
    %v1562 = vunpack.c.l.s4 1983009808
    %v1563 = vunpack.c.0.s8 %v1562
    %v1564 = vlaneseq
    %v1565 = vshrl.u32 %v1564, 7
    %v1566 = vsub.s32 %v1563, %v1565
    %v1567 = vrot.slane %v1556, %v1566
    %v1569 = vunpack.c.l.s4 1983009808
    %v1570 = vunpack.c.0.s8 %v1569
    %v1571 = vlaneseq
    %v1572 = vshrl.u32 %v1571, 7
    %v1573 = vsub.s32 %v1570, %v1572
    %v1574 = vrot.slane %v1560, %v1573
    %v1575 = vcombine.high %v1567, %v1567
    %v1576 = vcombine.high %v1574, %v1574
    %v1577 = vcombine.high %v1557, %v1557
    %v1579 = vunpack.c.l.s4 1983009808
    %v1580 = vunpack.c.0.s8 %v1579
    %v1581 = vlaneseq
    %v1582 = vshrl.u32 %v1581, 7
    %v1583 = vsub.s32 %v1580, %v1582
    %v1584 = vrot.slane %v1557, %v1583
    %v1586 = vunpack.c.l.s4 1983009808
    %v1587 = vunpack.c.0.s8 %v1586
    %v1588 = vlaneseq
    %v1589 = vshrl.u32 %v1588, 7
    %v1590 = vsub.s32 %v1587, %v1589
    %v1591 = vrot.slane %v1577, %v1590
    %v1592 = vcombine.high %v1584, %v1584
    %v1593 = vcombine.high %v1591, %v1591
    %v1602 = vsub.f32 %v1054, %v1567
    %v1603 = vsub.f32 %v1056, %v1575
    %v1604 = vsub.f32 %v1218, %v1574
    %v1605 = vsub.f32 %v1220, %v1576
    %v1606 = vsub.f32 %v1382, %v1584
    %v1607 = vsub.f32 %v1384, %v1592
    %v1608 = vsub.f32 %v1546, %v1591
    %v1609 = vsub.f32 %v1548, %v1593
    %v1610 = vmul.f32 %v1602, %v364
    %v1611 = vmul.f32 %v1603, %v364
    %v1612 = vmul.f32 %v1604, %v364
    %v1613 = vmul.f32 %v1605, %v364
    %v1614 = vmul.f32 %v1606, %v364
    %v1615 = vmul.f32 %v1607, %v364
    %v1616 = vmul.f32 %v1608, %v364
    %v1617 = vmul.f32 %v1609, %v364
    %v1618 = vmul.f32 %v1610, %v1610
    %v1619 = vmul.f32 %v1611, %v1611
    %v1620 = vmul.f32 %v1612, %v1612
    %v1621 = vmul.f32 %v1613, %v1613
    %v1622 = vmul.f32 %v1614, %v1614
    %v1623 = vmul.f32 %v1615, %v1615
    %v1624 = vmul.f32 %v1616, %v1616
    %v1625 = vmul.f32 %v1617, %v1617
    %vm1626 = vcmask 1041408
    %v1627 = vsel %vm1626, %v1618, 0.0
    %v1628 = vsel %vm1626, %v1619, 0.0
    %v1629 = vadd.f32 %v1627, %v1628
    %v1630 = vsel %vm1626, %v1620, 0.0
    %v1631 = vadd.f32 %v1629, %v1630
    %v1632 = vsel %vm1626, %v1621, 0.0
    %v1633 = vadd.f32 %v1631, %v1632
    %v1634 = vsel %vm1626, %v1622, 0.0
    %v1635 = vadd.f32 %v1633, %v1634
    %v1636 = vsel %vm1626, %v1623, 0.0
    %v1637 = vadd.f32 %v1635, %v1636
    %v1638 = vsel %vm1626, %v1624, 0.0
    %v1639 = vadd.f32 %v1637, %v1638
    %v1640 = vsel %vm1626, %v1625, 0.0
    %v1641 = vadd.f32 %v1639, %v1640
    %1642 = vadd.xlane.f32.xlu0 %v1641
    %v1643 = vpop.xlane.xlu0 %1642
    %v1644 = vrot.slane %v1643, 4
    %v1645 = vadd.f32 %v1643, %v1644
    %v1646 = vrot.slane %v1645, 2
    %v1647 = vadd.f32 %v1645, %v1646
    %v1648 = vrot.slane %v1647, 1
    %v1649 = vadd.f32 %v1647, %v1648
    %s1650 = vtos %v1649
    %s1651 = smul.f32 %s1650, 0.00048828125
    %v1652 = vstv %s1651
    %1653 = vst [vmem:[#allocation15] sm:$0x1] %v1652
    %v1654 = vstv %s379
    %1655 = vst [vmem:[#allocation16] sm:$0x1] %v1654
    // Predicated region
    $region50: #{tpu_custom_call.1} parent=1 // pred_check
      _
    $region51: #{tpu_custom_call.1} parent=1 // pred_check_branch
      %1657 = sbr.rel (0) target = $region53
    $region52: #{tpu_custom_call.1} parent=1 // pred_region
      %s1659 = ssub.s32 16, 16
      %1660 = vsyncadd [#allocation6], %s1659
      %s1662 = sshll.u32 [#allocation15], 4
      %s1663 = int_to_ptr.vmem [resolvable:$true] %s1662
      %1665 = dma.vmem_to_hbm [thread:$0]  %s1663, 16, %s7, [#allocation6]
    $region53: #{tpu_custom_call.1} parent=1 // pred_fallthru
      _
    // Predicated region
    $region54: #{tpu_custom_call.1} parent=1 // pred_check
      _
    $region55: #{tpu_custom_call.1} parent=1 // pred_check_branch
      %1667 = sbr.rel (0) target = $region57
    $region56: #{tpu_custom_call.1} parent=1 // pred_region
      %s1669 = ssub.s32 16, 16
      %1670 = vsyncadd [#allocation17], %s1669
      %s1672 = sshll.u32 [#allocation16], 4
      %s1673 = int_to_ptr.vmem [resolvable:$true] %s1672
      %1675 = dma.vmem_to_hbm [thread:$0]  %s1673, 16, %s8, [#allocation17]
    $region57: #{tpu_custom_call.1} parent=1 // pred_fallthru
      _
    // Predicated region
    $region58: #{tpu_custom_call.1} parent=1 // pred_check
      _
    $region59: #{tpu_custom_call.1} parent=1 // pred_check_branch
      %1677 = sbr.rel (0) target = $region61
    $region60: #{tpu_custom_call.1} parent=1 // pred_region
      %1678 = dma.done [#allocation6], 16
    $region61: #{tpu_custom_call.1} parent=1 // pred_fallthru
      _
    // Predicated region
    $region62: #{tpu_custom_call.1} parent=1 // pred_check
      _
    $region63: #{tpu_custom_call.1} parent=1 // pred_check_branch
      %1680 = sbr.rel (0) target = $region65
    $region64: #{tpu_custom_call.1} parent=1 // pred_region
      %1681 = dma.done [#allocation17], 16
    $region65: #{tpu_custom_call.1} parent=1 // pred_fallthru
      _
    %1682 = vsyncpa [#allocation5], 1
    %1683 = vsyncpa [#allocation8], 1
    %1684 = vsyncpa [#allocation11], 1
    %1685 = vsyncpa [#allocation14], 1
    %1686 = vsyncpa [#allocation6], 1
    %1687 = vsyncpa [#allocation17], 1
  %1688 = vsyncmov [#allocation3]
  %s1689 = vpop.sfrf %1688
  %p1690 = scmp.eq.s32.totalorder %s1689, 0
  %p1691 = pneg %p1690
  %1693 = shalt.err (%p1691)

</llo_original>
